<compile_context>
chip_gen: v7x
topology: tpu7x:2x2x1
jax: 0.10.0
libtpu: 0.0.40
codegen_flags: <defaults>
</compile_context>

<pallas_src>
import functools

import jax
import jax.numpy as jnp
from jax.experimental import pallas as pl
from jax.experimental.pallas import tpu as pltpu


def _hete_attention_kernel(mp_ref, x_ref, wk_ref, wqsel_ref, sumseg_ref,
                           expw_ref, segsq_ref, expn_ref, u_ref, f_ref,
                           *, n_path, n_facet, emb_dim):
    P, F, E = n_path, n_facet, emb_dim
    FE = F * E
    PF = P * F
    LANES = f_ref.shape[-1]                     # 128 (padded attention width)
    rows = mp_ref.shape[0]
    f32 = jnp.float32
    cdt = wk_ref.dtype                          # bf16 MXU compute dtype

    # ---- per-path W_k projection (128-wide kron(I_F, W_k^T)) + logits ----------
    # pv_p = mp_p @ kron(I_F, W_k^T); logits[:, p*F+f] = sum_e tanh(pv_p)[:, f*E+e]*wq[p,e]
    pvs = []
    logits = jnp.zeros((rows, LANES), f32)
    for p in range(P):                                           # static unroll
        mp_p = mp_ref[:, p * FE:(p + 1) * FE].astype(cdt)        # (rows, FE) bf16
        pv_p = jnp.dot(mp_p, wk_ref[...], preferred_element_type=f32)
        pvs.append(pv_p)
        z_p = jnp.tanh(pv_p).astype(cdt)                         # EUP, then bf16
        logits = logits + jnp.dot(z_p, wqsel_ref[p * FE:(p + 1) * FE, :],
                                  preferred_element_type=f32)    # (rows, 128)

    # mask the padding columns (>= P*F)
    lane = jax.lax.broadcasted_iota(jnp.int32, (1, LANES), 1)
    logits = jnp.where(lane < PF, logits, jnp.float32(-1e9))

    # ---- softmax over each path's F facet lanes (true per-segment max) ---------
    m = jnp.zeros((rows, LANES), f32)
    for p in range(P):                                           # P masked row maxes
        seg = (lane >= p * F) & (lane < (p + 1) * F)             # (1, LANES)
        seg_max = jnp.max(jnp.where(seg, logits, jnp.float32(-1e30)),
                          axis=-1, keepdims=True)                # (rows, 1)
        m = jnp.where(seg, seg_max, m)
    e = jnp.exp(logits - m)                                      # padding lanes -> 0
    s = jnp.dot(e.astype(cdt), sumseg_ref[...],
                preferred_element_type=f32)                      # per-path sums
    att = e * pl.reciprocal(jnp.maximum(s, 1e-30), approx=True)  # (rows, 128)
    # TODO(synk): dropout omitted -- reference F.dropout is identity in eval mode.

    # lane-dense padded store of the attention weights (cols >= P*F are zero)
    f_ref[...] = att.astype(f_ref.dtype)

    # ---- u = sum_P(path_val * att) + x ------------------------------------------
    # expand attention col (p*F+f) over the E embedding lanes (bf16 0/1 matmul;
    # att itself rounds to bf16 here, ~0.4% relative, inside tolerance).
    att_c = att.astype(cdt)
    u = x_ref[...].astype(f32)                                   # (rows, FE) f32
    for p in range(P):
        aw = jnp.dot(att_c, expw_ref[:, p * FE:(p + 1) * FE],
                     preferred_element_type=f32)                 # (rows, FE)
        u = u + pvs[p] * aw

    # ---- per-facet L2 normalisation: F.normalize(u, dim=3) ----------------------
    usq = (u * u).astype(cdt)
    ss = jnp.dot(usq, segsq_ref[...], preferred_element_type=f32)    # (rows, 128)
    inv = jax.lax.rsqrt(jnp.maximum(ss, 1e-24))                  # == 1/max(||u||,1e-12)
    invw = jnp.dot(inv.astype(cdt), expn_ref[...],
                   preferred_element_type=f32)                   # (rows, FE)
    u_ref[...] = (u * invw).astype(u_ref.dtype)


def hete_attention(feature, metapath_feature, wk, wq, *, n_path, n_facet,
                   row_tile=None, out_dtype=None):
    """Pallas implementation of HeteAttention.forward (eval mode).

    wk is the Linear weight stored already transposed (torch weight.T), so the
    projection is x @ wk.  Outputs are bf16 (kernel is HBM-bound; halves
    writeback); pass out_dtype=jnp.float32 to up-cast in the wrapper.
    """
    B, N = feature.shape[0], feature.shape[1]
    E = wk.shape[0]
    P, F = n_path, n_facet
    FE = F * E
    PFE = P * FE
    PF = P * F
    LANES = 128
    assert PF <= LANES, "n_path * n_facet must fit in one 128-lane row"
    assert FE % LANES == 0, "n_facet * emb_dim must be a multiple of 128"
    assert feature.shape[2] == FE, "feature last dim must be n_facet * emb_dim"
    assert metapath_feature.shape[2] == P and metapath_feature.shape[3] == FE
    BN = B * N

    f32 = jnp.float32
    cdt = jnp.bfloat16

    # ---- row tiling (no host-side pad; ragged last block handled by Pallas) -----
    if row_tile is None:
        kind = jax.devices()[0].device_kind.lower()
        # v6e/v7x: bigger row tiles get closer to the HBM roofline; v5e stays 512.
        row_tile = 512 if "v5" in kind else 1024
    half8 = (((BN + 1) // 2 + 7) // 8) * 8     # aim for >=2 grid steps (v7x 2 TCs)
    tile = max(8, min(row_tile, half8))
    n_tiles = pl.cdiv(BN, tile)

    # free reshapes; inputs streamed at their own dtype (no extra astype pass)
    mp2d = metapath_feature.reshape(BN, PFE)
    x2d = feature.reshape(BN, FE)

    # ---- host-prepared constant operands (all bf16 for single-pass MXU) ---------
    # per-facet block-diagonal W_k^T, applied per path inside the kernel
    wk128 = jnp.kron(jnp.eye(F, dtype=f32), wk.astype(f32)).astype(cdt)   # (FE, FE)
    # logits selection: logits[:, p*F+f] = sum_e z[:, p*FE + f*E + e] * wq[p, e]
    g = jnp.arange(PF)
    wq_rows = wq.astype(f32)[g // F]                            # (P*F, E)
    onehot_g = jax.nn.one_hot(g, LANES, dtype=f32)              # (P*F, 128)
    wqsel = (wq_rows[:, :, None] * onehot_g[:, None, :]).reshape(PFE, LANES).astype(cdt)
    # softmax denominator: per-path sum over its F columns (replicated back)
    cid = jnp.arange(LANES)
    valid = cid < PF
    sumseg = (((cid[:, None] // F) == (cid[None, :] // F))
              & valid[:, None] & valid[None, :]).astype(f32).astype(cdt)  # (128,128)
    # expand attention columns (p*F+f) back to (p,f,e) lanes
    expw = jax.nn.one_hot(jnp.arange(PFE) // E, LANES, dtype=f32).T.astype(cdt)
    # per-facet sum-of-squares + broadcast-back for the L2 normalisation
    segsq = jax.nn.one_hot(jnp.arange(FE) // E, LANES, dtype=f32).astype(cdt)
    expn = jax.nn.one_hot(jnp.arange(FE) // E, LANES, dtype=f32).T.astype(cdt)

    kernel = functools.partial(_hete_attention_kernel,
                               n_path=P, n_facet=F, emb_dim=E)

    row_map = lambda i: (i, 0)
    const_map = lambda i: (0, 0)

    u2d, f2d = pl.pallas_call(
        kernel,
        out_shape=(
            jax.ShapeDtypeStruct((BN, FE), cdt),                 # u (bf16)
            jax.ShapeDtypeStruct((BN, LANES), cdt),              # padded attention
        ),
        grid_spec=pltpu.PrefetchScalarGridSpec(
            num_scalar_prefetch=0,
            grid=(n_tiles,),
            in_specs=[
                pl.BlockSpec((tile, PFE), row_map),              # metapath (f32 stream)
                pl.BlockSpec((tile, FE), row_map),               # feature  (f32 stream)
                pl.BlockSpec((FE, FE), const_map),               # kron(I_F, W_k^T) bf16
                pl.BlockSpec((PFE, LANES), const_map),           # wq selection bf16
                pl.BlockSpec((LANES, LANES), const_map),         # softmax segment sum
                pl.BlockSpec((LANES, PFE), const_map),           # attention expand
                pl.BlockSpec((FE, LANES), const_map),            # facet sum-of-squares
                pl.BlockSpec((LANES, FE), const_map),            # norm expand
            ],
            out_specs=[
                pl.BlockSpec((tile, FE), row_map),               # u
                pl.BlockSpec((tile, LANES), row_map),            # attention (padded)
            ],
        ),
        compiler_params=pltpu.CompilerParams(
            dimension_semantics=("parallel",),
            vmem_limit_bytes=32 * 1024 * 1024),
    )(mp2d, x2d, wk128, wqsel, sumseg, expw, segsq, expn)

    u = u2d.reshape(B, N, FE)
    fpf = f2d[:, :PF].reshape(B, N, P, F)
    fs = [fpf[:, :, p, :] for p in range(P)]
    if out_dtype is not None:
        u = u.astype(out_dtype)
        fs = [t.astype(out_dtype) for t in fs]
    return u, fs


def hete_attention_ref(feature, metapath_feature, wk, wq, *, n_path, n_facet):
    """Pure-JAX reference mirroring the PyTorch forward (eval mode)."""
    B, N = feature.shape[0], feature.shape[1]
    E = wk.shape[0]
    mp = metapath_feature.reshape(B, N, n_path, n_facet, E).astype(jnp.float32)
    x = feature.reshape(B, N, n_facet, E).astype(jnp.float32)
    pv = mp @ wk.astype(jnp.float32)                 # Linear(emb, emb, bias=False)
    z = jnp.tanh(pv)
    f = jnp.sum(z * wq[None, None, :, None, :], axis=4)
    f = jax.nn.softmax(f, axis=3)
    u = jnp.sum(pv * f[..., None], axis=2)
    u = u + x
    nrm = jnp.sqrt(jnp.sum(u * u, axis=3, keepdims=True))
    u = u / jnp.maximum(nrm, 1e-12)
    return u.reshape(B, N, n_facet * E), [f[:, :, p, :] for p in range(n_path)]


if __name__ == "__main__":
    # Module hyper-parameters (small, consistent with the forward):
    n_facet = 4
    emb_dim = 32
    cur_dim = n_facet * emb_dim        # 128
    n_path = 3
    B, n_with_neg = 2, 8

    key = jax.random.PRNGKey(0)
    k_feat, k_mp, k_wk, k_wq = jax.random.split(key, 4)

    feature = jax.random.normal(k_feat, (B, n_with_neg, cur_dim), jnp.float32)
    metapath_feature = jax.random.normal(
        k_mp, (B, n_with_neg, n_path, cur_dim), jnp.float32)

    # Deterministic synthetic parameters (weight_k stored as W.T so kernel uses x @ wk).
    wk = jax.random.normal(k_wk, (emb_dim, emb_dim), jnp.float32) * 0.1
    wq = jax.random.normal(k_wq, (n_path, emb_dim), jnp.float32) * 0.5

    u, fs = hete_attention(feature, metapath_feature, wk, wq,
                           n_path=n_path, n_facet=n_facet)
    u = jax.block_until_ready(u)
    fs = [jax.block_until_ready(f) for f in fs]

    # Reference with the same bf16 rounding the kernel applies to MXU operands
    # (metapath / wk / wq are rounded; feature is streamed and added in f32).
    q = lambda a: a.astype(jnp.bfloat16).astype(jnp.float32)
    u_ref, fs_ref = hete_attention_ref(feature, q(metapath_feature), q(wk), q(wq),
                                       n_path=n_path, n_facet=n_facet)

    assert u.shape == (B, n_with_neg, cur_dim)
    assert len(fs) == n_path and fs[0].shape == (B, n_with_neg, n_facet)
    u32 = u.astype(jnp.float32)
    assert jnp.allclose(u32, u_ref, atol=2e-2, rtol=2e-2), \
        float(jnp.max(jnp.abs(u32 - u_ref)))
    for a, b in zip(fs, fs_ref):
        a32 = a.astype(jnp.float32)
        assert jnp.allclose(a32, b, atol=2e-2, rtol=2e-2), \
            float(jnp.max(jnp.abs(a32 - b)))

    print("KERNEL_OK")
</pallas_src>

<mosaic_0001>
module attributes {stable_mosaic.version = 11 : i64} {
  func.func @_hete_attention_kernel(%arg0: i32, %arg1: memref<8x384xf32, #tpu.memory_space<vmem>>, %arg2: memref<8x128xf32, #tpu.memory_space<vmem>>, %arg3: memref<128x128xbf16, #tpu.memory_space<vmem>>, %arg4: memref<384x128xbf16, #tpu.memory_space<vmem>>, %arg5: memref<128x128xbf16, #tpu.memory_space<vmem>>, %arg6: memref<128x384xbf16, #tpu.memory_space<vmem>>, %arg7: memref<128x128xbf16, #tpu.memory_space<vmem>>, %arg8: memref<128x128xbf16, #tpu.memory_space<vmem>>, %arg9: memref<8x128xbf16, #tpu.memory_space<vmem>>, %arg10: memref<8x128xbf16, #tpu.memory_space<vmem>>) attributes {dimension_semantics = [#tpu.dimension_semantics<parallel>], iteration_bounds = array<i64: 2>, scalar_prefetch = 0 : i64, scratch_operands = 0 : i64, tpu.core_type = #tpu.core_type<tc>, window_params = [{transform_indices = @transform_0, window_bounds = array<i64: 8, 384>}, {transform_indices = @transform_1, window_bounds = array<i64: 8, 128>}, {pipeline_mode = #tpu.pipeline_mode<synchronous>, transform_indices = @transform_2, window_bounds = array<i64: 128, 128>}, {pipeline_mode = #tpu.pipeline_mode<synchronous>, transform_indices = @transform_3, window_bounds = array<i64: 384, 128>}, {pipeline_mode = #tpu.pipeline_mode<synchronous>, transform_indices = @transform_4, window_bounds = array<i64: 128, 128>}, {pipeline_mode = #tpu.pipeline_mode<synchronous>, transform_indices = @transform_5, window_bounds = array<i64: 128, 384>}, {pipeline_mode = #tpu.pipeline_mode<synchronous>, transform_indices = @transform_6, window_bounds = array<i64: 128, 128>}, {pipeline_mode = #tpu.pipeline_mode<synchronous>, transform_indices = @transform_7, window_bounds = array<i64: 128, 128>}, {transform_indices = @transform_8, window_bounds = array<i64: 8, 128>}, {transform_indices = @transform_9, window_bounds = array<i64: 8, 128>}]} {
    %cst = arith.constant 0.000000e+00 : f32
    %0 = vector.broadcast %cst : f32 to vector<8x128xf32>
    %c0 = arith.constant 0 : index
    %c0_0 = arith.constant 0 : index
    %1 = vector.load %arg1[%c0, %c0_0] : memref<8x384xf32, #tpu.memory_space<vmem>>, vector<8x128xf32>
    %2 = arith.truncf %1 : vector<8x128xf32> to vector<8x128xbf16>
    %c0_1 = arith.constant 0 : index
    %c0_2 = arith.constant 0 : index
    %3 = vector.load %arg3[%c0_1, %c0_2] : memref<128x128xbf16, #tpu.memory_space<vmem>>, vector<128x128xbf16>
    %cst_3 = arith.constant dense<0.000000e+00> : vector<8x128xf32>
    %4 = tpu.matmul %2, %3, %cst_3 {dimension_numbers = #tpu.dot_dimension_numbers<[1], [0], [0], [1], [0, 0, 1, 1], [], []>} : vector<8x128xbf16>, vector<128x128xbf16>, vector<8x128xf32> -> vector<8x128xf32>
    %5 = math.tanh %4 : vector<8x128xf32>
    %6 = arith.truncf %5 : vector<8x128xf32> to vector<8x128xbf16>
    %c0_4 = arith.constant 0 : index
    %c0_5 = arith.constant 0 : index
    %7 = vector.load %arg4[%c0_4, %c0_5] : memref<384x128xbf16, #tpu.memory_space<vmem>>, vector<128x128xbf16>
    %cst_6 = arith.constant dense<0.000000e+00> : vector<8x128xf32>
    %8 = tpu.matmul %6, %7, %cst_6 {dimension_numbers = #tpu.dot_dimension_numbers<[1], [0], [0], [1], [0, 0, 1, 1], [], []>} : vector<8x128xbf16>, vector<128x128xbf16>, vector<8x128xf32> -> vector<8x128xf32>
    %9 = arith.addf %0, %8 : vector<8x128xf32>
    %c0_7 = arith.constant 0 : index
    %c128 = arith.constant 128 : index
    %10 = vector.load %arg1[%c0_7, %c128] : memref<8x384xf32, #tpu.memory_space<vmem>>, vector<8x128xf32>
    %11 = arith.truncf %10 : vector<8x128xf32> to vector<8x128xbf16>
    %c0_8 = arith.constant 0 : index
    %c0_9 = arith.constant 0 : index
    %12 = vector.load %arg3[%c0_8, %c0_9] : memref<128x128xbf16, #tpu.memory_space<vmem>>, vector<128x128xbf16>
    %cst_10 = arith.constant dense<0.000000e+00> : vector<8x128xf32>
    %13 = tpu.matmul %11, %12, %cst_10 {dimension_numbers = #tpu.dot_dimension_numbers<[1], [0], [0], [1], [0, 0, 1, 1], [], []>} : vector<8x128xbf16>, vector<128x128xbf16>, vector<8x128xf32> -> vector<8x128xf32>
    %14 = math.tanh %13 : vector<8x128xf32>
    %15 = arith.truncf %14 : vector<8x128xf32> to vector<8x128xbf16>
    %c128_11 = arith.constant 128 : index
    %c0_12 = arith.constant 0 : index
    %16 = vector.load %arg4[%c128_11, %c0_12] : memref<384x128xbf16, #tpu.memory_space<vmem>>, vector<128x128xbf16>
    %cst_13 = arith.constant dense<0.000000e+00> : vector<8x128xf32>
    %17 = tpu.matmul %15, %16, %cst_13 {dimension_numbers = #tpu.dot_dimension_numbers<[1], [0], [0], [1], [0, 0, 1, 1], [], []>} : vector<8x128xbf16>, vector<128x128xbf16>, vector<8x128xf32> -> vector<8x128xf32>
    %18 = arith.addf %9, %17 : vector<8x128xf32>
    %c0_14 = arith.constant 0 : index
    %c256 = arith.constant 256 : index
    %19 = vector.load %arg1[%c0_14, %c256] : memref<8x384xf32, #tpu.memory_space<vmem>>, vector<8x128xf32>
    %20 = arith.truncf %19 : vector<8x128xf32> to vector<8x128xbf16>
    %c0_15 = arith.constant 0 : index
    %c0_16 = arith.constant 0 : index
    %21 = vector.load %arg3[%c0_15, %c0_16] : memref<128x128xbf16, #tpu.memory_space<vmem>>, vector<128x128xbf16>
    %cst_17 = arith.constant dense<0.000000e+00> : vector<8x128xf32>
    %22 = tpu.matmul %20, %21, %cst_17 {dimension_numbers = #tpu.dot_dimension_numbers<[1], [0], [0], [1], [0, 0, 1, 1], [], []>} : vector<8x128xbf16>, vector<128x128xbf16>, vector<8x128xf32> -> vector<8x128xf32>
    %23 = math.tanh %22 : vector<8x128xf32>
    %24 = arith.truncf %23 : vector<8x128xf32> to vector<8x128xbf16>
    %c256_18 = arith.constant 256 : index
    %c0_19 = arith.constant 0 : index
    %25 = vector.load %arg4[%c256_18, %c0_19] : memref<384x128xbf16, #tpu.memory_space<vmem>>, vector<128x128xbf16>
    %cst_20 = arith.constant dense<0.000000e+00> : vector<8x128xf32>
    %26 = tpu.matmul %24, %25, %cst_20 {dimension_numbers = #tpu.dot_dimension_numbers<[1], [0], [0], [1], [0, 0, 1, 1], [], []>} : vector<8x128xbf16>, vector<128x128xbf16>, vector<8x128xf32> -> vector<8x128xf32>
    %27 = arith.addf %18, %26 : vector<8x128xf32>
    %28 = tpu.iota {dimensions = array<i32: 1>} : vector<1x128xi32>
    %c12_i32 = arith.constant 12 : i32
    %29 = vector.broadcast %c12_i32 : i32 to vector<1x128xi32>
    %30 = arith.cmpi slt, %28, %29 : vector<1x128xi32>
    %cst_21 = arith.constant -1.000000e+09 : f32
    %31 = vector.shape_cast %30 : vector<1x128xi1> to vector<1x128xi1>
    %32 = vector.broadcast %31 : vector<1x128xi1> to vector<8x128xi1>
    %33 = vector.broadcast %cst_21 : f32 to vector<8x128xf32>
    %34 = arith.select %32, %27, %33 : vector<8x128xi1>, vector<8x128xf32>
    %cst_22 = arith.constant 0.000000e+00 : f32
    %35 = vector.broadcast %cst_22 : f32 to vector<8x128xf32>
    %c0_i32 = arith.constant 0 : i32
    %36 = vector.broadcast %c0_i32 : i32 to vector<1x128xi32>
    %37 = arith.cmpi sge, %28, %36 : vector<1x128xi32>
    %c4_i32 = arith.constant 4 : i32
    %38 = vector.broadcast %c4_i32 : i32 to vector<1x128xi32>
    %39 = arith.cmpi slt, %28, %38 : vector<1x128xi32>
    %40 = arith.andi %37, %39 : vector<1x128xi1>
    %cst_23 = arith.constant -1.000000e+30 : f32
    %41 = vector.shape_cast %40 : vector<1x128xi1> to vector<1x128xi1>
    %42 = vector.broadcast %41 : vector<1x128xi1> to vector<8x128xi1>
    %43 = vector.broadcast %cst_23 : f32 to vector<8x128xf32>
    %44 = arith.select %42, %34, %43 : vector<8x128xi1>, vector<8x128xf32>
    %cst_24 = arith.constant dense<0xFF800000> : vector<8xf32>
    %45 = vector.multi_reduction <maximumf>, %44, %cst_24 [1] : vector<8x128xf32> to vector<8xf32>
    %46 = vector.shape_cast %45 : vector<8xf32> to vector<8x1xf32>
    %47 = vector.shape_cast %40 : vector<1x128xi1> to vector<1x128xi1>
    %48 = vector.broadcast %47 : vector<1x128xi1> to vector<8x128xi1>
    %49 = vector.shape_cast %46 : vector<8x1xf32> to vector<8x1xf32>
    %50 = vector.broadcast %49 : vector<8x1xf32> to vector<8x128xf32>
    %51 = arith.select %48, %50, %35 : vector<8x128xi1>, vector<8x128xf32>
    %c4_i32_25 = arith.constant 4 : i32
    %52 = vector.broadcast %c4_i32_25 : i32 to vector<1x128xi32>
    %53 = arith.cmpi sge, %28, %52 : vector<1x128xi32>
    %c8_i32 = arith.constant 8 : i32
    %54 = vector.broadcast %c8_i32 : i32 to vector<1x128xi32>
    %55 = arith.cmpi slt, %28, %54 : vector<1x128xi32>
    %56 = arith.andi %53, %55 : vector<1x128xi1>
    %cst_26 = arith.constant -1.000000e+30 : f32
    %57 = vector.shape_cast %56 : vector<1x128xi1> to vector<1x128xi1>
    %58 = vector.broadcast %57 : vector<1x128xi1> to vector<8x128xi1>
    %59 = vector.broadcast %cst_26 : f32 to vector<8x128xf32>
    %60 = arith.select %58, %34, %59 : vector<8x128xi1>, vector<8x128xf32>
    %cst_27 = arith.constant dense<0xFF800000> : vector<8xf32>
    %61 = vector.multi_reduction <maximumf>, %60, %cst_27 [1] : vector<8x128xf32> to vector<8xf32>
    %62 = vector.shape_cast %61 : vector<8xf32> to vector<8x1xf32>
    %63 = vector.shape_cast %56 : vector<1x128xi1> to vector<1x128xi1>
    %64 = vector.broadcast %63 : vector<1x128xi1> to vector<8x128xi1>
    %65 = vector.shape_cast %62 : vector<8x1xf32> to vector<8x1xf32>
    %66 = vector.broadcast %65 : vector<8x1xf32> to vector<8x128xf32>
    %67 = arith.select %64, %66, %51 : vector<8x128xi1>, vector<8x128xf32>
    %c8_i32_28 = arith.constant 8 : i32
    %68 = vector.broadcast %c8_i32_28 : i32 to vector<1x128xi32>
    %69 = arith.cmpi sge, %28, %68 : vector<1x128xi32>
    %c12_i32_29 = arith.constant 12 : i32
    %70 = vector.broadcast %c12_i32_29 : i32 to vector<1x128xi32>
    %71 = arith.cmpi slt, %28, %70 : vector<1x128xi32>
    %72 = arith.andi %69, %71 : vector<1x128xi1>
    %cst_30 = arith.constant -1.000000e+30 : f32
    %73 = vector.shape_cast %72 : vector<1x128xi1> to vector<1x128xi1>
    %74 = vector.broadcast %73 : vector<1x128xi1> to vector<8x128xi1>
    %75 = vector.broadcast %cst_30 : f32 to vector<8x128xf32>
    %76 = arith.select %74, %34, %75 : vector<8x128xi1>, vector<8x128xf32>
    %cst_31 = arith.constant dense<0xFF800000> : vector<8xf32>
    %77 = vector.multi_reduction <maximumf>, %76, %cst_31 [1] : vector<8x128xf32> to vector<8xf32>
    %78 = vector.shape_cast %77 : vector<8xf32> to vector<8x1xf32>
    %79 = vector.shape_cast %72 : vector<1x128xi1> to vector<1x128xi1>
    %80 = vector.broadcast %79 : vector<1x128xi1> to vector<8x128xi1>
    %81 = vector.shape_cast %78 : vector<8x1xf32> to vector<8x1xf32>
    %82 = vector.broadcast %81 : vector<8x1xf32> to vector<8x128xf32>
    %83 = arith.select %80, %82, %67 : vector<8x128xi1>, vector<8x128xf32>
    %84 = arith.subf %34, %83 : vector<8x128xf32>
    %85 = math.exp %84 : vector<8x128xf32>
    %86 = arith.truncf %85 : vector<8x128xf32> to vector<8x128xbf16>
    %c0_32 = arith.constant 0 : index
    %c0_33 = arith.constant 0 : index
    %87 = vector.load %arg5[%c0_32, %c0_33] : memref<128x128xbf16, #tpu.memory_space<vmem>>, vector<128x128xbf16>
    %cst_34 = arith.constant dense<0.000000e+00> : vector<8x128xf32>
    %88 = tpu.matmul %86, %87, %cst_34 {dimension_numbers = #tpu.dot_dimension_numbers<[1], [0], [0], [1], [0, 0, 1, 1], [], []>} : vector<8x128xbf16>, vector<128x128xbf16>, vector<8x128xf32> -> vector<8x128xf32>
    %cst_35 = arith.constant 1.000000e-30 : f32
    %89 = vector.broadcast %cst_35 : f32 to vector<8x128xf32>
    %90 = arith.maximumf %88, %89 : vector<8x128xf32>
    %91 = tpu.reciprocal %90 {approx = true} : vector<8x128xf32> -> vector<8x128xf32>
    %92 = arith.mulf %85, %91 : vector<8x128xf32>
    %93 = arith.truncf %92 : vector<8x128xf32> to vector<8x128xbf16>
    %c0_36 = arith.constant 0 : index
    %c0_37 = arith.constant 0 : index
    %94 = vector.load %arg10[%c0_36, %c0_37] : memref<8x128xbf16, #tpu.memory_space<vmem>>, vector<8x128xbf16>
    tpu.vector_store %arg10[%c0_36, %c0_37], %93 {strides = array<i32>} : memref<8x128xbf16, #tpu.memory_space<vmem>>, vector<8x128xbf16>,
    %95 = arith.truncf %92 : vector<8x128xf32> to vector<8x128xbf16>
    %c0_38 = arith.constant 0 : index
    %c0_39 = arith.constant 0 : index
    %96 = vector.load %arg2[%c0_38, %c0_39] : memref<8x128xf32, #tpu.memory_space<vmem>>, vector<8x128xf32>
    %c0_40 = arith.constant 0 : index
    %c0_41 = arith.constant 0 : index
    %97 = vector.load %arg6[%c0_40, %c0_41] : memref<128x384xbf16, #tpu.memory_space<vmem>>, vector<128x128xbf16>
    %cst_42 = arith.constant dense<0.000000e+00> : vector<8x128xf32>
    %98 = tpu.matmul %95, %97, %cst_42 {dimension_numbers = #tpu.dot_dimension_numbers<[1], [0], [0], [1], [0, 0, 1, 1], [], []>} : vector<8x128xbf16>, vector<128x128xbf16>, vector<8x128xf32> -> vector<8x128xf32>
    %99 = arith.mulf %4, %98 : vector<8x128xf32>
    %100 = arith.addf %96, %99 : vector<8x128xf32>
    %c0_43 = arith.constant 0 : index
    %c128_44 = arith.constant 128 : index
    %101 = vector.load %arg6[%c0_43, %c128_44] : memref<128x384xbf16, #tpu.memory_space<vmem>>, vector<128x128xbf16>
    %cst_45 = arith.constant dense<0.000000e+00> : vector<8x128xf32>
    %102 = tpu.matmul %95, %101, %cst_45 {dimension_numbers = #tpu.dot_dimension_numbers<[1], [0], [0], [1], [0, 0, 1, 1], [], []>} : vector<8x128xbf16>, vector<128x128xbf16>, vector<8x128xf32> -> vector<8x128xf32>
    %103 = arith.mulf %13, %102 : vector<8x128xf32>
    %104 = arith.addf %100, %103 : vector<8x128xf32>
    %c0_46 = arith.constant 0 : index
    %c256_47 = arith.constant 256 : index
    %105 = vector.load %arg6[%c0_46, %c256_47] : memref<128x384xbf16, #tpu.memory_space<vmem>>, vector<128x128xbf16>
    %cst_48 = arith.constant dense<0.000000e+00> : vector<8x128xf32>
    %106 = tpu.matmul %95, %105, %cst_48 {dimension_numbers = #tpu.dot_dimension_numbers<[1], [0], [0], [1], [0, 0, 1, 1], [], []>} : vector<8x128xbf16>, vector<128x128xbf16>, vector<8x128xf32> -> vector<8x128xf32>
    %107 = arith.mulf %22, %106 : vector<8x128xf32>
    %108 = arith.addf %104, %107 : vector<8x128xf32>
    %109 = arith.mulf %108, %108 : vector<8x128xf32>
    %110 = arith.truncf %109 : vector<8x128xf32> to vector<8x128xbf16>
    %c0_49 = arith.constant 0 : index
    %c0_50 = arith.constant 0 : index
    %111 = vector.load %arg7[%c0_49, %c0_50] : memref<128x128xbf16, #tpu.memory_space<vmem>>, vector<128x128xbf16>
    %cst_51 = arith.constant dense<0.000000e+00> : vector<8x128xf32>
    %112 = tpu.matmul %110, %111, %cst_51 {dimension_numbers = #tpu.dot_dimension_numbers<[1], [0], [0], [1], [0, 0, 1, 1], [], []>} : vector<8x128xbf16>, vector<128x128xbf16>, vector<8x128xf32> -> vector<8x128xf32>
    %cst_52 = arith.constant 1.000000e-24 : f32
    %113 = vector.broadcast %cst_52 : f32 to vector<8x128xf32>
    %114 = arith.maximumf %112, %113 : vector<8x128xf32>
    %115 = math.rsqrt %114 : vector<8x128xf32>
    %116 = arith.truncf %115 : vector<8x128xf32> to vector<8x128xbf16>
    %c0_53 = arith.constant 0 : index
    %c0_54 = arith.constant 0 : index
    %117 = vector.load %arg8[%c0_53, %c0_54] : memref<128x128xbf16, #tpu.memory_space<vmem>>, vector<128x128xbf16>
    %cst_55 = arith.constant dense<0.000000e+00> : vector<8x128xf32>
    %118 = tpu.matmul %116, %117, %cst_55 {dimension_numbers = #tpu.dot_dimension_numbers<[1], [0], [0], [1], [0, 0, 1, 1], [], []>} : vector<8x128xbf16>, vector<128x128xbf16>, vector<8x128xf32> -> vector<8x128xf32>
    %119 = arith.mulf %108, %118 : vector<8x128xf32>
    %120 = arith.truncf %119 : vector<8x128xf32> to vector<8x128xbf16>
    %c0_56 = arith.constant 0 : index
    %c0_57 = arith.constant 0 : index
    %121 = vector.load %arg9[%c0_56, %c0_57] : memref<8x128xbf16, #tpu.memory_space<vmem>>, vector<8x128xbf16>
    tpu.vector_store %arg9[%c0_56, %c0_57], %120 {strides = array<i32>} : memref<8x128xbf16, #tpu.memory_space<vmem>>, vector<8x128xbf16>,
    return
  }
  func.func @transform_0(%arg0: i32) -> (i32, i32) {
    %c0_i32 = arith.constant 0 : i32
    %c0_i32_0 = arith.constant 0 : i32
    return %arg0, %c0_i32 : i32, i32
  }
  func.func @transform_1(%arg0: i32) -> (i32, i32) {
    %c0_i32 = arith.constant 0 : i32
    %c0_i32_0 = arith.constant 0 : i32
    return %arg0, %c0_i32 : i32, i32
  }
  func.func @transform_2(%arg0: i32) -> (i32, i32) {
    %c0_i32 = arith.constant 0 : i32
    %c0_i32_0 = arith.constant 0 : i32
    %c0_i32_1 = arith.constant 0 : i32
    return %c0_i32, %c0_i32_0 : i32, i32
  }
  func.func @transform_3(%arg0: i32) -> (i32, i32) {
    %c0_i32 = arith.constant 0 : i32
    %c0_i32_0 = arith.constant 0 : i32
    %c0_i32_1 = arith.constant 0 : i32
    return %c0_i32, %c0_i32_0 : i32, i32
  }
  func.func @transform_4(%arg0: i32) -> (i32, i32) {
    %c0_i32 = arith.constant 0 : i32
    %c0_i32_0 = arith.constant 0 : i32
    %c0_i32_1 = arith.constant 0 : i32
    return %c0_i32, %c0_i32_0 : i32, i32
  }
  func.func @transform_5(%arg0: i32) -> (i32, i32) {
    %c0_i32 = arith.constant 0 : i32
    %c0_i32_0 = arith.constant 0 : i32
    %c0_i32_1 = arith.constant 0 : i32
    return %c0_i32, %c0_i32_0 : i32, i32
  }
  func.func @transform_6(%arg0: i32) -> (i32, i32) {
    %c0_i32 = arith.constant 0 : i32
    %c0_i32_0 = arith.constant 0 : i32
    %c0_i32_1 = arith.constant 0 : i32
    return %c0_i32, %c0_i32_0 : i32, i32
  }
  func.func @transform_7(%arg0: i32) -> (i32, i32) {
    %c0_i32 = arith.constant 0 : i32
    %c0_i32_0 = arith.constant 0 : i32
    %c0_i32_1 = arith.constant 0 : i32
    return %c0_i32, %c0_i32_0 : i32, i32
  }
  func.func @transform_8(%arg0: i32) -> (i32, i32) {
    %c0_i32 = arith.constant 0 : i32
    %c0_i32_0 = arith.constant 0 : i32
    return %arg0, %c0_i32 : i32, i32
  }
  func.func @transform_9(%arg0: i32) -> (i32, i32) {
    %c0_i32 = arith.constant 0 : i32
    %c0_i32_0 = arith.constant 0 : i32
    return %arg0, %c0_i32 : i32, i32
  }
}

</mosaic_0001>

<llo_original>
// kernel: tpu_custom_call.1
$region0: #{tpu_custom_call.1}
  #allocation0 [shape = 'u32[]', space=smem, size = 0x4, offset = 0x4, fixed_abs, tag = 'smem constant byte address 0x4 - core index']
  #allocation1 [shape = 'u32[144,128]{1,0:T(1,128)}', space=vmem, size = 0x12000, scoped, tag = 'internal scratch']
  %s0 = inlined_call_operand.hbm [shape: f32[16,384], index: 0, kind: input, shape index: {}]
  %s1 = inlined_call_operand.hbm [shape: f32[16,128], index: 1, kind: input, shape index: {}]
  %s2 = inlined_call_operand.hbm [shape: bf16[128,128], index: 2, kind: input, shape index: {}]
  %s3 = inlined_call_operand.hbm [shape: bf16[384,128], index: 3, kind: input, shape index: {}]
  %s4 = inlined_call_operand.hbm [shape: bf16[128,128], index: 4, kind: input, shape index: {}]
  %s5 = inlined_call_operand.hbm [shape: bf16[128,384], index: 5, kind: input, shape index: {}]
  %s6 = inlined_call_operand.hbm [shape: bf16[128,128], index: 6, kind: input, shape index: {}]
  %s7 = inlined_call_operand.hbm [shape: bf16[128,128], index: 7, kind: input, shape index: {}]
  %s8 = inlined_call_operand.hbm [shape: bf16[16,128], index: 8, kind: output, shape index: {0}]
  %s9 = inlined_call_operand.hbm [shape: bf16[16,128], index: 9, kind: output, shape index: {1}]
  %10 = xla_tuple %s8, %s9
  %s11 = sld [smem:[#allocation0]]
  $region105: #{tpu_custom_call.1} parent=0
    _
  %s13 = ssub.s32 1, %s11
  %s14 = scalar_select 0, %s13, %s11
  $region1: #{tpu_custom_call.1} parent=0
    #allocation2 [shape = 'u8[24576]{0}', space=vmem, size = 0x6000, scoped, tag = 'input window, operand 0']
    #allocation3 [shape = 's32[2]{0}', space=sflag, size = 0x8, scoped, tag = 'scoped memory for tpu_custom_call.1']
    #allocation4 [shape = 's32[2]{0}', space=sflag, size = 0x8, scoped, tag = 'scoped memory for tpu_custom_call.1']
    #allocation5 [shape = 'u8[8192]{0}', space=vmem, size = 0x2000, scoped, tag = 'input window, operand 1']
    #allocation6 [shape = 's32[2]{0}', space=sflag, size = 0x8, scoped, tag = 'scoped memory for tpu_custom_call.1']
    #allocation7 [shape = 'u8[32768]{0}', space=vmem, size = 0x8000, scoped, tag = 'input window, operand 2, single buffered']
    #allocation8 [shape = 'u8[98304]{0}', space=vmem, size = 0x18000, scoped, tag = 'input window, operand 3, single buffered']
    #allocation9 [shape = 's32[1]{0}', space=sflag, size = 0x4, scoped, tag = 'scoped memory for tpu_custom_call.1']
    #allocation10 [shape = 'u8[32768]{0}', space=vmem, size = 0x8000, scoped, tag = 'input window, operand 4, single buffered']
    #allocation11 [shape = 'u8[98304]{0}', space=vmem, size = 0x18000, scoped, tag = 'input window, operand 5, single buffered']
    #allocation12 [shape = 's32[1]{0}', space=sflag, size = 0x4, scoped, tag = 'scoped memory for tpu_custom_call.1']
    #allocation13 [shape = 'u8[32768]{0}', space=vmem, size = 0x8000, scoped, tag = 'input window, operand 6, single buffered']
    #allocation14 [shape = 'u8[32768]{0}', space=vmem, size = 0x8000, scoped, tag = 'input window, operand 7, single buffered']
    #allocation15 [shape = 's32[1]{0}', space=sflag, size = 0x4, scoped, tag = 'scoped memory for tpu_custom_call.1']
    #allocation16 [shape = 'u8[4096]{0}', space=vmem, size = 0x1000, scoped, tag = 'output window, operand 0']
    #allocation17 [shape = 'u8[4096]{0}', space=vmem, size = 0x1000, scoped, tag = 'output window, operand 1']
    #allocation18 [shape = 's32[2]{0}', space=sflag, size = 0x8, scoped, tag = 'scoped memory for tpu_custom_call.1']
    %15 = vsyncpa [#allocation3], 0
    %s16 = scalar_lea.sflag [#allocation3], 1
    %17 = vsyncpa %s16, 0
    %18 = vsyncpa [#allocation6], 0
    %s19 = scalar_lea.sflag [#allocation6], 1
    %20 = vsyncpa %s19, 0
    %21 = vsyncpa [#allocation9], 0
    %22 = vsyncpa [#allocation12], 0
    %23 = vsyncpa [#allocation15], 0
    %24 = vsyncpa [#allocation4], 0
    %s25 = scalar_lea.sflag [#allocation4], 1
    %26 = vsyncpa %s25, 0
    %27 = vsyncpa [#allocation18], 0
    %s28 = scalar_lea.sflag [#allocation18], 1
    %29 = vsyncpa %s28, 0
    loop: start=0, step=1, limit=4
    $region2: #{tpu_custom_call.1} parent=1 // loop_pre_header
      _
    $region3: #{tpu_custom_call.1} parent=1 // loop_header
      %s31 = sphi 0, %s35
      %p32 = scmp.ge.s32.totalorder %s31, 4
      %s41 = sphi 0, %s43
      %s44 = sphi 0, %s41
      %s45 = sphi 0, %s44
      %s61 = sphi 0, %s45
      %s67 = sphi 0, %s69
      %s70 = sphi 0, %s67
      %s71 = sphi 0, %s70
      %s87 = sphi 0, %s71
      %s91 = sphi 0, %s91
      %s93 = sphi 0, %s91
      %s94 = sphi 0, %s93
      %s108 = sphi 0, %s94
      %s112 = sphi 0, %s112
      %s114 = sphi 0, %s112
      %s115 = sphi 0, %s114
      %s129 = sphi 0, %s115
      %s133 = sphi 0, %s133
      %s135 = sphi 0, %s133
      %s136 = sphi 0, %s135
      %s150 = sphi 0, %s136
      %s154 = sphi 0, %s154
      %s156 = sphi 0, %s154
      %s157 = sphi 0, %s156
      %s171 = sphi 0, %s157
      %s175 = sphi 0, %s175
      %s177 = sphi 0, %s175
      %s178 = sphi 0, %s177
      %s192 = sphi 0, %s178
      %s196 = sphi 0, %s196
      %s198 = sphi 0, %s196
      %s199 = sphi 0, %s198
      %s213 = sphi 0, %s199
      %s219 = sphi 0, %s221
      %s222 = sphi 0, %s219
      %s223 = sphi 0, %s222
      %s239 = sphi 0, %s223
      %s245 = sphi 0, %s247
      %s248 = sphi 0, %s245
      %s249 = sphi 0, %s248
      %s265 = sphi 0, %s249
    $region4: #{tpu_custom_call.1} parent=1 // loop_header_branch
      %34 = sbr.rel (%p32) target = $region8
    $region5: #{tpu_custom_call.1} parent=1 // loop_body
      %s36 = ssub.s32 %s31, 1
      %s37 = ssub.s32 %s31, 2
      %s38 = sadd.s32 %s31, 1
      %s39 = ssub.s32 %s31, %s38
      %p40 = scmp.eq.s32.totalorder %s39, 0
      %s42 = sadd.s32 %s41, 1
      %s43 = scalar_select %p40, %s41, %s42
      %p46 = pneg %p40
      %p47 = scmp.eq.s32.totalorder %s31, 1
      %p48 = por %p46, %p47
      %p49 = scmp.ne.s32.totalorder %s41, %s44
      %p50 = scmp.eq.s32.totalorder %s31, 0
      %p51 = por %p49, %p50
      %p52 = scmp.ne.s32.totalorder %s41, %s44
      %p53 = scmp.eq.s32.totalorder %s36, 1
      %p54 = por %p52, %p53
      %p55 = scmp.ne.s32.totalorder %s44, %s45
      %p56 = scmp.eq.s32.totalorder %s36, 0
      %p57 = por %p55, %p56
      %p58 = scmp.ne.s32.totalorder %s44, %s45
      %p59 = scmp.eq.s32.totalorder %s37, 1
      %p60 = por %p58, %p59
      %p62 = scmp.ne.s32.totalorder %s45, %s61
      %p63 = scmp.eq.s32.totalorder %s37, 0
      %p64 = por %p62, %p63
      %s65 = ssub.s32 %s31, %s38
      %p66 = scmp.eq.s32.totalorder %s65, 0
      %s68 = sadd.s32 %s67, 1
      %s69 = scalar_select %p66, %s67, %s68
      %p72 = pneg %p66
      %p73 = scmp.eq.s32.totalorder %s31, 1
      %p74 = por %p72, %p73
      %p75 = scmp.ne.s32.totalorder %s67, %s70
      %p76 = scmp.eq.s32.totalorder %s31, 0
      %p77 = por %p75, %p76
      %p78 = scmp.ne.s32.totalorder %s67, %s70
      %p79 = scmp.eq.s32.totalorder %s36, 1
      %p80 = por %p78, %p79
      %p81 = scmp.ne.s32.totalorder %s70, %s71
      %p82 = scmp.eq.s32.totalorder %s36, 0
      %p83 = por %p81, %p82
      %p84 = scmp.ne.s32.totalorder %s70, %s71
      %p85 = scmp.eq.s32.totalorder %s37, 1
      %p86 = por %p84, %p85
      %p88 = scmp.ne.s32.totalorder %s71, %s87
      %p89 = scmp.eq.s32.totalorder %s37, 0
      %p90 = por %p88, %p89
      %s92 = sadd.s32 %s91, 1
      %p95 = scmp.eq.s32.totalorder %s31, 1
      %p96 = scmp.ne.s32.totalorder %s91, %s93
      %p97 = scmp.eq.s32.totalorder %s31, 0
      %p98 = por %p96, %p97
      %p99 = scmp.ne.s32.totalorder %s91, %s93
      %p100 = scmp.eq.s32.totalorder %s36, 1
      %p101 = por %p99, %p100
      %p102 = scmp.ne.s32.totalorder %s93, %s94
      %p103 = scmp.eq.s32.totalorder %s36, 0
      %p104 = por %p102, %p103
      %p105 = scmp.ne.s32.totalorder %s93, %s94
      %p106 = scmp.eq.s32.totalorder %s37, 1
      %p107 = por %p105, %p106
      %p109 = scmp.ne.s32.totalorder %s94, %s108
      %p110 = scmp.eq.s32.totalorder %s37, 0
      %p111 = por %p109, %p110
      %s113 = sadd.s32 %s112, 1
      %p116 = scmp.eq.s32.totalorder %s31, 1
      %p117 = scmp.ne.s32.totalorder %s112, %s114
      %p118 = scmp.eq.s32.totalorder %s31, 0
      %p119 = por %p117, %p118
      %p120 = scmp.ne.s32.totalorder %s112, %s114
      %p121 = scmp.eq.s32.totalorder %s36, 1
      %p122 = por %p120, %p121
      %p123 = scmp.ne.s32.totalorder %s114, %s115
      %p124 = scmp.eq.s32.totalorder %s36, 0
      %p125 = por %p123, %p124
      %p126 = scmp.ne.s32.totalorder %s114, %s115
      %p127 = scmp.eq.s32.totalorder %s37, 1
      %p128 = por %p126, %p127
      %p130 = scmp.ne.s32.totalorder %s115, %s129
      %p131 = scmp.eq.s32.totalorder %s37, 0
      %p132 = por %p130, %p131
      %s134 = sadd.s32 %s133, 1
      %p137 = scmp.eq.s32.totalorder %s31, 1
      %p138 = scmp.ne.s32.totalorder %s133, %s135
      %p139 = scmp.eq.s32.totalorder %s31, 0
      %p140 = por %p138, %p139
      %p141 = scmp.ne.s32.totalorder %s133, %s135
      %p142 = scmp.eq.s32.totalorder %s36, 1
      %p143 = por %p141, %p142
      %p144 = scmp.ne.s32.totalorder %s135, %s136
      %p145 = scmp.eq.s32.totalorder %s36, 0
      %p146 = por %p144, %p145
      %p147 = scmp.ne.s32.totalorder %s135, %s136
      %p148 = scmp.eq.s32.totalorder %s37, 1
      %p149 = por %p147, %p148
      %p151 = scmp.ne.s32.totalorder %s136, %s150
      %p152 = scmp.eq.s32.totalorder %s37, 0
      %p153 = por %p151, %p152
      %s155 = sadd.s32 %s154, 1
      %p158 = scmp.eq.s32.totalorder %s31, 1
      %p159 = scmp.ne.s32.totalorder %s154, %s156
      %p160 = scmp.eq.s32.totalorder %s31, 0
      %p161 = por %p159, %p160
      %p162 = scmp.ne.s32.totalorder %s154, %s156
      %p163 = scmp.eq.s32.totalorder %s36, 1
      %p164 = por %p162, %p163
      %p165 = scmp.ne.s32.totalorder %s156, %s157
      %p166 = scmp.eq.s32.totalorder %s36, 0
      %p167 = por %p165, %p166
      %p168 = scmp.ne.s32.totalorder %s156, %s157
      %p169 = scmp.eq.s32.totalorder %s37, 1
      %p170 = por %p168, %p169
      %p172 = scmp.ne.s32.totalorder %s157, %s171
      %p173 = scmp.eq.s32.totalorder %s37, 0
      %p174 = por %p172, %p173
      %s176 = sadd.s32 %s175, 1
      %p179 = scmp.eq.s32.totalorder %s31, 1
      %p180 = scmp.ne.s32.totalorder %s175, %s177
      %p181 = scmp.eq.s32.totalorder %s31, 0
      %p182 = por %p180, %p181
      %p183 = scmp.ne.s32.totalorder %s175, %s177
      %p184 = scmp.eq.s32.totalorder %s36, 1
      %p185 = por %p183, %p184
      %p186 = scmp.ne.s32.totalorder %s177, %s178
      %p187 = scmp.eq.s32.totalorder %s36, 0
      %p188 = por %p186, %p187
      %p189 = scmp.ne.s32.totalorder %s177, %s178
      %p190 = scmp.eq.s32.totalorder %s37, 1
      %p191 = por %p189, %p190
      %p193 = scmp.ne.s32.totalorder %s178, %s192
      %p194 = scmp.eq.s32.totalorder %s37, 0
      %p195 = por %p193, %p194
      %s197 = sadd.s32 %s196, 1
      %p200 = scmp.eq.s32.totalorder %s31, 1
      %p201 = scmp.ne.s32.totalorder %s196, %s198
      %p202 = scmp.eq.s32.totalorder %s31, 0
      %p203 = por %p201, %p202
      %p204 = scmp.ne.s32.totalorder %s196, %s198
      %p205 = scmp.eq.s32.totalorder %s36, 1
      %p206 = por %p204, %p205
      %p207 = scmp.ne.s32.totalorder %s198, %s199
      %p208 = scmp.eq.s32.totalorder %s36, 0
      %p209 = por %p207, %p208
      %p210 = scmp.ne.s32.totalorder %s198, %s199
      %p211 = scmp.eq.s32.totalorder %s37, 1
      %p212 = por %p210, %p211
      %p214 = scmp.ne.s32.totalorder %s199, %s213
      %p215 = scmp.eq.s32.totalorder %s37, 0
      %p216 = por %p214, %p215
      %s217 = ssub.s32 %s31, %s38
      %p218 = scmp.eq.s32.totalorder %s217, 0
      %s220 = sadd.s32 %s219, 1
      %s221 = scalar_select %p218, %s219, %s220
      %p224 = pneg %p218
      %p225 = scmp.eq.s32.totalorder %s31, 1
      %p226 = por %p224, %p225
      %p227 = scmp.ne.s32.totalorder %s219, %s222
      %p228 = scmp.eq.s32.totalorder %s31, 0
      %p229 = por %p227, %p228
      %p230 = scmp.ne.s32.totalorder %s219, %s222
      %p231 = scmp.eq.s32.totalorder %s36, 1
      %p232 = por %p230, %p231
      %p233 = scmp.ne.s32.totalorder %s222, %s223
      %p234 = scmp.eq.s32.totalorder %s36, 0
      %p235 = por %p233, %p234
      %p236 = scmp.ne.s32.totalorder %s222, %s223
      %p237 = scmp.eq.s32.totalorder %s37, 1
      %p238 = por %p236, %p237
      %p240 = scmp.ne.s32.totalorder %s223, %s239
      %p241 = scmp.eq.s32.totalorder %s37, 0
      %p242 = por %p240, %p241
      %s243 = ssub.s32 %s31, %s38
      %p244 = scmp.eq.s32.totalorder %s243, 0
      %s246 = sadd.s32 %s245, 1
      %s247 = scalar_select %p244, %s245, %s246
      %p250 = pneg %p244
      %p251 = scmp.eq.s32.totalorder %s31, 1
      %p252 = por %p250, %p251
      %p253 = scmp.ne.s32.totalorder %s245, %s248
      %p254 = scmp.eq.s32.totalorder %s31, 0
      %p255 = por %p253, %p254
      %p256 = scmp.ne.s32.totalorder %s245, %s248
      %p257 = scmp.eq.s32.totalorder %s36, 1
      %p258 = por %p256, %p257
      %p259 = scmp.ne.s32.totalorder %s248, %s249
      %p260 = scmp.eq.s32.totalorder %s36, 0
      %p261 = por %p259, %p260
      %p262 = scmp.ne.s32.totalorder %s248, %s249
      %p263 = scmp.eq.s32.totalorder %s37, 1
      %p264 = por %p262, %p263
      %p266 = scmp.ne.s32.totalorder %s249, %s265
      %p267 = scmp.eq.s32.totalorder %s37, 0
      %p268 = por %p266, %p267
      %p269 = scmp.le.s32.totalorder 1, %s31
      %p270 = scmp.lt.s32.totalorder %s31, 3
      %p271 = pnand %p269, %p270
      %p272 = pneg %p271
      // Predicated region
      $region9: #{tpu_custom_call.1} parent=5 // pred_check
        _
      $region10: #{tpu_custom_call.1} parent=5 // pred_check_branch
        %274 = sbr.rel (%p271) target = $region12
      $region11: #{tpu_custom_call.1} parent=5 // pred_region
        %s275 = ssub.s32 %s31, 1
        // Predicated region
        $region13: #{tpu_custom_call.1} parent=11 // pred_check
          %p276 = pneg %p104
        $region14: #{tpu_custom_call.1} parent=11 // pred_check_branch
          %278 = sbr.rel (%p276) target = $region16
        $region15: #{tpu_custom_call.1} parent=11 // pred_region
          %s280 = ssub.s32 1024, 1024
          %281 = vsyncadd [#allocation6], %s280
          %s282 = sshll.u32 [#allocation7], 4
          %s283 = int_to_ptr.vmem [resolvable:$true] %s282
          %288 = dma.hbm_to_vmem [thread:$0]  %s2, 1024, %s283, [#allocation6], 64, 64, 4
        $region16: #{tpu_custom_call.1} parent=11 // pred_fallthru
          _
        // Predicated region
        $region17: #{tpu_custom_call.1} parent=11 // pred_check
          %p289 = pneg %p125
        $region18: #{tpu_custom_call.1} parent=11 // pred_check_branch
          %291 = sbr.rel (%p289) target = $region20
        $region19: #{tpu_custom_call.1} parent=11 // pred_region
          %s293 = ssub.s32 3072, 3072
          %294 = vsyncadd [#allocation9], %s293
          %s295 = sshll.u32 [#allocation8], 4
          %s296 = int_to_ptr.vmem [resolvable:$true] %s295
          %301 = dma.hbm_to_vmem [thread:$0]  %s3, 3072, %s296, [#allocation9], 64, 64, 4
        $region20: #{tpu_custom_call.1} parent=11 // pred_fallthru
          _
        // Predicated region
        $region21: #{tpu_custom_call.1} parent=11 // pred_check
          %p302 = pneg %p146
        $region22: #{tpu_custom_call.1} parent=11 // pred_check_branch
          %304 = sbr.rel (%p302) target = $region24
        $region23: #{tpu_custom_call.1} parent=11 // pred_region
          %s306 = ssub.s32 1024, 1024
          %307 = vsyncadd [#allocation9], %s306
          %s308 = sshll.u32 [#allocation10], 4
          %s309 = int_to_ptr.vmem [resolvable:$true] %s308
          %314 = dma.hbm_to_vmem [thread:$0]  %s4, 1024, %s309, [#allocation9], 64, 64, 4
        $region24: #{tpu_custom_call.1} parent=11 // pred_fallthru
          _
        // Predicated region
        $region25: #{tpu_custom_call.1} parent=11 // pred_check
          %p315 = pneg %p167
        $region26: #{tpu_custom_call.1} parent=11 // pred_check_branch
          %317 = sbr.rel (%p315) target = $region28
        $region27: #{tpu_custom_call.1} parent=11 // pred_region
          %s319 = ssub.s32 3072, 3072
          %320 = vsyncadd [#allocation12], %s319
          %s321 = sshll.u32 [#allocation11], 4
          %s322 = int_to_ptr.vmem [resolvable:$true] %s321
          %327 = dma.hbm_to_vmem [thread:$0]  %s5, 3072, %s322, [#allocation12], 192, 192, 12
        $region28: #{tpu_custom_call.1} parent=11 // pred_fallthru
          _
        // Predicated region
        $region29: #{tpu_custom_call.1} parent=11 // pred_check
          %p328 = pneg %p188
        $region30: #{tpu_custom_call.1} parent=11 // pred_check_branch
          %330 = sbr.rel (%p328) target = $region32
        $region31: #{tpu_custom_call.1} parent=11 // pred_region
          %s332 = ssub.s32 1024, 1024
          %333 = vsyncadd [#allocation12], %s332
          %s334 = sshll.u32 [#allocation13], 4
          %s335 = int_to_ptr.vmem [resolvable:$true] %s334
          %340 = dma.hbm_to_vmem [thread:$0]  %s6, 1024, %s335, [#allocation12], 64, 64, 4
        $region32: #{tpu_custom_call.1} parent=11 // pred_fallthru
          _
        // Predicated region
        $region33: #{tpu_custom_call.1} parent=11 // pred_check
          %p341 = pneg %p209
        $region34: #{tpu_custom_call.1} parent=11 // pred_check_branch
          %343 = sbr.rel (%p341) target = $region36
        $region35: #{tpu_custom_call.1} parent=11 // pred_region
          %s345 = ssub.s32 1024, 1024
          %346 = vsyncadd [#allocation15], %s345
          %s347 = sshll.u32 [#allocation14], 4
          %s348 = int_to_ptr.vmem [resolvable:$true] %s347
          %353 = dma.hbm_to_vmem [thread:$0]  %s7, 1024, %s348, [#allocation15], 64, 64, 4
        $region36: #{tpu_custom_call.1} parent=11 // pred_fallthru
          _
      $region12: #{tpu_custom_call.1} parent=5 // pred_fallthru
        _
      %p354 = scmp.lt.s32.totalorder %s31, 2
      // Predicated region
      $region37: #{tpu_custom_call.1} parent=5 // pred_check
        %p355 = pneg %p354
      $region38: #{tpu_custom_call.1} parent=5 // pred_check_branch
        %357 = sbr.rel (%p355) target = $region40
      $region39: #{tpu_custom_call.1} parent=5 // pred_region
        // Predicated region
        $region41: #{tpu_custom_call.1} parent=39 // pred_check
          %p358 = pneg %p51
        $region42: #{tpu_custom_call.1} parent=39 // pred_check_branch
          %360 = sbr.rel (%p358) target = $region44
        $region43: #{tpu_custom_call.1} parent=39 // pred_region
          %s361 = sand.u32 %s41, 1
          %s362 = scalar_lea.sflag [#allocation3], %s361
          %s363 = sand.u32 %s41, 1
          %s364 = smul.addr %s363, 24
          %s365 = scalar_lea.vmem [#allocation2], %s364
          %s367 = ssub.s32 384, 384
          %368 = vsyncadd %s362, %s367
          %s369 = smul.addr %s31, 3
          %s370 = smul.addr %s369, 128
          %s371 = scalar_lea.hbm %s0, %s370
          %s373 = sshll.u32 %s365, 4
          %s374 = int_to_ptr.vmem [resolvable:$true] %s373
          %376 = dma.hbm_to_vmem [thread:$0]  %s371, 384, %s374, %s362
        $region44: #{tpu_custom_call.1} parent=39 // pred_fallthru
          _
        // Predicated region
        $region45: #{tpu_custom_call.1} parent=39 // pred_check
          %p377 = pneg %p77
        $region46: #{tpu_custom_call.1} parent=39 // pred_check_branch
          %379 = sbr.rel (%p377) target = $region48
        $region47: #{tpu_custom_call.1} parent=39 // pred_region
          %s380 = sand.u32 %s31, 1
          %s381 = scalar_lea.sflag [#allocation6], %s380
          %s382 = sand.u32 %s67, 1
          %s383 = smul.addr %s382, 8
          %s384 = scalar_lea.vmem [#allocation5], %s383
          %s386 = ssub.s32 128, 128
          %387 = vsyncadd %s381, %s386
          %s388 = smul.addr %s31, 128
          %s389 = scalar_lea.hbm %s1, %s388
          %s391 = sshll.u32 %s384, 4
          %s392 = int_to_ptr.vmem [resolvable:$true] %s391
          %394 = dma.hbm_to_vmem [thread:$0]  %s389, 128, %s392, %s381
        $region48: #{tpu_custom_call.1} parent=39 // pred_fallthru
          _
      $region40: #{tpu_custom_call.1} parent=5 // pred_fallthru
        _
      %p395 = scmp.le.s32.totalorder 1, %s31
      %p396 = scmp.lt.s32.totalorder %s31, 3
      %p397 = pnand %p395, %p396
      %p398 = pneg %p397
      // Predicated region
      $region49: #{tpu_custom_call.1} parent=5 // pred_check
        _
      $region50: #{tpu_custom_call.1} parent=5 // pred_check_branch
        %400 = sbr.rel (%p397) target = $region52
      $region51: #{tpu_custom_call.1} parent=5 // pred_region
        %s401 = ssub.s32 %s31, 1
        %s402 = sand.u32 %s44, 1
        %s403 = scalar_lea.sflag [#allocation3], %s402
        %s404 = sand.u32 %s44, 1
        %s405 = smul.addr %s404, 24
        %s406 = scalar_lea.vmem [#allocation2], %s405
        // Predicated region
        $region53: #{tpu_custom_call.1} parent=51 // pred_check
          %p407 = pneg %p57
        $region54: #{tpu_custom_call.1} parent=51 // pred_check_branch
          %409 = sbr.rel (%p407) target = $region56
        $region55: #{tpu_custom_call.1} parent=51 // pred_region
          %410 = dma.done %s403, 384
        $region56: #{tpu_custom_call.1} parent=51 // pred_fallthru
          _
        %s411 = sand.u32 %s36, 1
        %s412 = scalar_lea.sflag [#allocation6], %s411
        %s413 = sand.u32 %s70, 1
        %s414 = smul.addr %s413, 8
        %s415 = scalar_lea.vmem [#allocation5], %s414
        // Predicated region
        $region57: #{tpu_custom_call.1} parent=51 // pred_check
          %p416 = pneg %p83
        $region58: #{tpu_custom_call.1} parent=51 // pred_check_branch
          %418 = sbr.rel (%p416) target = $region60
        $region59: #{tpu_custom_call.1} parent=51 // pred_region
          %419 = dma.done %s412, 128
        $region60: #{tpu_custom_call.1} parent=51 // pred_fallthru
          _
        // Predicated region
        $region61: #{tpu_custom_call.1} parent=51 // pred_check
          %p420 = pneg %p104
        $region62: #{tpu_custom_call.1} parent=51 // pred_check_branch
          %422 = sbr.rel (%p420) target = $region64
        $region63: #{tpu_custom_call.1} parent=51 // pred_region
          %423 = dma.done [#allocation6], 1024
        $region64: #{tpu_custom_call.1} parent=51 // pred_fallthru
          _
        // Predicated region
        $region65: #{tpu_custom_call.1} parent=51 // pred_check
          %p424 = pneg %p125
        $region66: #{tpu_custom_call.1} parent=51 // pred_check_branch
          %426 = sbr.rel (%p424) target = $region68
        $region67: #{tpu_custom_call.1} parent=51 // pred_region
          %427 = dma.done [#allocation9], 3072
        $region68: #{tpu_custom_call.1} parent=51 // pred_fallthru
          _
        // Predicated region
        $region69: #{tpu_custom_call.1} parent=51 // pred_check
          %p428 = pneg %p146
        $region70: #{tpu_custom_call.1} parent=51 // pred_check_branch
          %430 = sbr.rel (%p428) target = $region72
        $region71: #{tpu_custom_call.1} parent=51 // pred_region
          %431 = dma.done [#allocation9], 1024
        $region72: #{tpu_custom_call.1} parent=51 // pred_fallthru
          _
        // Predicated region
        $region73: #{tpu_custom_call.1} parent=51 // pred_check
          %p432 = pneg %p167
        $region74: #{tpu_custom_call.1} parent=51 // pred_check_branch
          %434 = sbr.rel (%p432) target = $region76
        $region75: #{tpu_custom_call.1} parent=51 // pred_region
          %435 = dma.done [#allocation12], 3072
        $region76: #{tpu_custom_call.1} parent=51 // pred_fallthru
          _
        // Predicated region
        $region77: #{tpu_custom_call.1} parent=51 // pred_check
          %p436 = pneg %p188
        $region78: #{tpu_custom_call.1} parent=51 // pred_check_branch
          %438 = sbr.rel (%p436) target = $region80
        $region79: #{tpu_custom_call.1} parent=51 // pred_region
          %439 = dma.done [#allocation12], 1024
        $region80: #{tpu_custom_call.1} parent=51 // pred_fallthru
          _
        // Predicated region
        $region81: #{tpu_custom_call.1} parent=51 // pred_check
          %p440 = pneg %p209
        $region82: #{tpu_custom_call.1} parent=51 // pred_check_branch
          %442 = sbr.rel (%p440) target = $region84
        $region83: #{tpu_custom_call.1} parent=51 // pred_region
          %443 = dma.done [#allocation15], 1024
        $region84: #{tpu_custom_call.1} parent=51 // pred_fallthru
          _
        %s444 = sand.u32 %s44, 1
        %s445 = scalar_lea.sflag [#allocation3], %s444
        %s446 = sand.u32 %s44, 1
        %s447 = smul.addr %s446, 24
        %s448 = scalar_lea.vmem [#allocation2], %s447
        %p449 = pneg %p57
        %p450 = pneg %p54
        %s451 = sand.u32 %s36, 1
        %s452 = scalar_lea.sflag [#allocation6], %s451
        %s453 = sand.u32 %s70, 1
        %s454 = smul.addr %s453, 8
        %s455 = scalar_lea.vmem [#allocation5], %s454
        %p456 = pneg %p83
        %p457 = pneg %p80
        %p458 = pneg %p104
        %p459 = pneg %p101
        %p460 = pneg %p125
        %p461 = pneg %p122
        %p462 = pneg %p146
        %p463 = pneg %p143
        %p464 = pneg %p167
        %p465 = pneg %p164
        %p466 = pneg %p188
        %p467 = pneg %p185
        %p468 = pneg %p209
        %p469 = pneg %p206
        %p470 = pneg %p235
        %p471 = pneg %p232
        %s472 = sand.u32 %s222, 1
        %s473 = scalar_lea.sflag [#allocation4], %s472
        %s474 = sand.u32 %s222, 1
        %s475 = smul.addr %s474, 4
        %s476 = scalar_lea.vmem [#allocation16], %s475
        %p477 = pneg %p261
        %p478 = pneg %p258
        %s479 = sand.u32 %s248, 1
        %s480 = scalar_lea.sflag [#allocation18], %s479
        %s481 = sand.u32 %s248, 1
        %s482 = smul.addr %s481, 4
        %s483 = scalar_lea.vmem [#allocation17], %s482
        %v485 = vld [vmem:[%s406] sm:$0xff]
        %v486 = vpack.c.bf16 %v485, %v485
        %v487 = vld [vmem:[#allocation7] sm:$0xf]
        %v488 = vld [vmem:[#allocation7 + $0x4] sm:$0xf]
        %v489 = vld [vmem:[#allocation7 + $0x8] sm:$0xf]
        %v490 = vld [vmem:[#allocation7 + $0xc] sm:$0xf]
        %v491 = vld [vmem:[#allocation7 + $0x10] sm:$0xf]
        %v492 = vld [vmem:[#allocation7 + $0x14] sm:$0xf]
        %v493 = vld [vmem:[#allocation7 + $0x18] sm:$0xf]
        %v494 = vld [vmem:[#allocation7 + $0x1c] sm:$0xf]
        %v495 = vld [vmem:[#allocation7 + $0x20] sm:$0xf]
        %v496 = vld [vmem:[#allocation7 + $0x24] sm:$0xf]
        %v497 = vld [vmem:[#allocation7 + $0x28] sm:$0xf]
        %v498 = vld [vmem:[#allocation7 + $0x2c] sm:$0xf]
        %v499 = vld [vmem:[#allocation7 + $0x30] sm:$0xf]
        %v500 = vld [vmem:[#allocation7 + $0x34] sm:$0xf]
        %v501 = vld [vmem:[#allocation7 + $0x38] sm:$0xf]
        %v502 = vld [vmem:[#allocation7 + $0x3c] sm:$0xf]
        %v519 = vunpack.c.l.b16 %v487
        %v520 = vunpack.c.l.b16 %v488
        %v521 = vunpack.c.l.b16 %v489
        %v522 = vunpack.c.l.b16 %v490
        %v523 = vunpack.c.l.b16 %v491
        %v524 = vunpack.c.l.b16 %v492
        %v525 = vunpack.c.l.b16 %v493
        %v526 = vunpack.c.l.b16 %v494
        %v527 = vunpack.c.l.b16 %v495
        %v528 = vunpack.c.l.b16 %v496
        %v529 = vunpack.c.l.b16 %v497
        %v530 = vunpack.c.l.b16 %v498
        %v531 = vunpack.c.l.b16 %v499
        %v532 = vunpack.c.l.b16 %v500
        %v533 = vunpack.c.l.b16 %v501
        %v534 = vunpack.c.l.b16 %v502
        %v535 = vpack.c.b16 %v520, %v519
        %v536 = vpack.c.b16 %v522, %v521
        %v537 = vpack.c.b16 %v524, %v523
        %v538 = vpack.c.b16 %v526, %v525
        %v539 = vpack.c.b16 %v528, %v527
        %v540 = vpack.c.b16 %v530, %v529
        %v541 = vpack.c.b16 %v532, %v531
        %v542 = vpack.c.b16 %v534, %v533
        %551 = vmatprep.subr.bf16.mxu0 0
        %552 = vmatpush1.bf16.msra.mxu0 %v535
        %553 = vmatprep.subr.bf16.mxu0 0
        %554 = vmatpush1.bf16.msra.mxu0 %v536
        %555 = vmatprep.subr.bf16.mxu0 0
        %556 = vmatpush1.bf16.msra.mxu0 %v537
        %557 = vmatprep.subr.bf16.mxu0 0
        %558 = vmatpush1.bf16.msra.mxu0 %v538
        %559 = vmatprep.subr.bf16.mxu0 0
        %560 = vmatpush1.bf16.msra.mxu0 %v539
        %561 = vmatprep.subr.bf16.mxu0 0
        %562 = vmatpush1.bf16.msra.mxu0 %v540
        %563 = vmatprep.subr.bf16.mxu0 0
        %564 = vmatpush1.bf16.msra.mxu0 %v541
        %565 = vmatprep.subr.bf16.mxu0 0
        %566 = vmatpush1.bf16.msra.mxu0 %v542
        %567 = vmatprep.subr.bf16.mxu0 0
        %568 = vmatpush1.bf16.msra.mxu0 0
        %569 = vmatprep.subr.bf16.mxu0 0
        %570 = vmatpush1.bf16.msra.mxu0 0
        %571 = vmatprep.subr.bf16.mxu0 0
        %572 = vmatpush1.bf16.msra.mxu0 0
        %573 = vmatprep.subr.bf16.mxu0 0
        %574 = vmatpush1.bf16.msra.mxu0 0
        %575 = vmatprep.subr.bf16.mxu0 0
        %576 = vmatpush1.bf16.msra.mxu0 0
        %577 = vmatprep.subr.bf16.mxu0 0
        %578 = vmatpush1.bf16.msra.mxu0 0
        %579 = vmatprep.subr.bf16.mxu0 0
        %580 = vmatpush1.bf16.msra.mxu0 0
        %581 = vmatprep.subr.bf16.mxu0 0
        %582 = vmatpush1.bf16.msra.mxu0 0
        %583 = vmatprep.mubr.bf16.mxu0 0
        %584 = vmatmul.mubr.bf16.gmra.mrb[0].mxu0 %v486
        %v585 = vpop.f32.mrb[0].mxu0
        %v586 = vadd.f32 0.0, %v585
        %v587 = vpop.f32.mrb[0].mxu0
        %v588 = vpop.f32.mrb[0].mxu0
        %v589 = vpop.f32.mrb[0].mxu0
        %590 = vdwg.mxu0
        %v591 = vtanh.pop %v586
        %v592 = vpack.c.bf16 %v591, %v591
        %v593 = vld [vmem:[#allocation8] sm:$0xf]
        %v594 = vld [vmem:[#allocation8 + $0x4] sm:$0xf]
        %v595 = vld [vmem:[#allocation8 + $0x8] sm:$0xf]
        %v596 = vld [vmem:[#allocation8 + $0xc] sm:$0xf]
        %v597 = vld [vmem:[#allocation8 + $0x10] sm:$0xf]
        %v598 = vld [vmem:[#allocation8 + $0x14] sm:$0xf]
        %v599 = vld [vmem:[#allocation8 + $0x18] sm:$0xf]
        %v600 = vld [vmem:[#allocation8 + $0x1c] sm:$0xf]
        %v601 = vld [vmem:[#allocation8 + $0x20] sm:$0xf]
        %v602 = vld [vmem:[#allocation8 + $0x24] sm:$0xf]
        %v603 = vld [vmem:[#allocation8 + $0x28] sm:$0xf]
        %v604 = vld [vmem:[#allocation8 + $0x2c] sm:$0xf]
        %v605 = vld [vmem:[#allocation8 + $0x30] sm:$0xf]
        %v606 = vld [vmem:[#allocation8 + $0x34] sm:$0xf]
        %v607 = vld [vmem:[#allocation8 + $0x38] sm:$0xf]
        %v608 = vld [vmem:[#allocation8 + $0x3c] sm:$0xf]
        %v609 = vld [vmem:[%s406 + $0x8] sm:$0xff]
        %v610 = vpack.c.bf16 %v609, %v609
        %611 = vmatprep.subr.bf16.mxu0 0
        %612 = vmatpush1.bf16.msra.mxu0 %v535
        %613 = vmatprep.subr.bf16.mxu0 0
        %614 = vmatpush1.bf16.msra.mxu0 %v536
        %615 = vmatprep.subr.bf16.mxu0 0
        %616 = vmatpush1.bf16.msra.mxu0 %v537
        %617 = vmatprep.subr.bf16.mxu0 0
        %618 = vmatpush1.bf16.msra.mxu0 %v538
        %619 = vmatprep.subr.bf16.mxu0 0
        %620 = vmatpush1.bf16.msra.mxu0 %v539
        %621 = vmatprep.subr.bf16.mxu0 0
        %622 = vmatpush1.bf16.msra.mxu0 %v540
        %623 = vmatprep.subr.bf16.mxu0 0
        %624 = vmatpush1.bf16.msra.mxu0 %v541
        %625 = vmatprep.subr.bf16.mxu0 0
        %626 = vmatpush1.bf16.msra.mxu0 %v542
        %627 = vmatprep.subr.bf16.mxu0 0
        %628 = vmatpush1.bf16.msra.mxu0 0
        %629 = vmatprep.subr.bf16.mxu0 0
        %630 = vmatpush1.bf16.msra.mxu0 0
        %631 = vmatprep.subr.bf16.mxu0 0
        %632 = vmatpush1.bf16.msra.mxu0 0
        %633 = vmatprep.subr.bf16.mxu0 0
        %634 = vmatpush1.bf16.msra.mxu0 0
        %635 = vmatprep.subr.bf16.mxu0 0
        %636 = vmatpush1.bf16.msra.mxu0 0
        %637 = vmatprep.subr.bf16.mxu0 0
        %638 = vmatpush1.bf16.msra.mxu0 0
        %639 = vmatprep.subr.bf16.mxu0 0
        %640 = vmatpush1.bf16.msra.mxu0 0
        %641 = vmatprep.subr.bf16.mxu0 0
        %642 = vmatpush1.bf16.msra.mxu0 0
        %643 = vmatprep.mubr.bf16.mxu0 0
        %644 = vmatmul.mubr.bf16.gmra.mrb[0].mxu0 %v610
        %v645 = vpop.f32.mrb[0].mxu0
        %v646 = vadd.f32 0.0, %v645
        %v647 = vpop.f32.mrb[0].mxu0
        %v648 = vpop.f32.mrb[0].mxu0
        %v649 = vpop.f32.mrb[0].mxu0
        %650 = vdwg.mxu0
        %v651 = vtanh.pop %v646
        %v652 = vpack.c.bf16 %v651, %v651
        %v653 = vld [vmem:[#allocation8 + $0x40] sm:$0xf]
        %v654 = vld [vmem:[#allocation8 + $0x44] sm:$0xf]
        %v655 = vld [vmem:[#allocation8 + $0x48] sm:$0xf]
        %v656 = vld [vmem:[#allocation8 + $0x4c] sm:$0xf]
        %v657 = vld [vmem:[#allocation8 + $0x50] sm:$0xf]
        %v658 = vld [vmem:[#allocation8 + $0x54] sm:$0xf]
        %v659 = vld [vmem:[#allocation8 + $0x58] sm:$0xf]
        %v660 = vld [vmem:[#allocation8 + $0x5c] sm:$0xf]
        %v661 = vld [vmem:[#allocation8 + $0x60] sm:$0xf]
        %v662 = vld [vmem:[#allocation8 + $0x64] sm:$0xf]
        %v663 = vld [vmem:[#allocation8 + $0x68] sm:$0xf]
        %v664 = vld [vmem:[#allocation8 + $0x6c] sm:$0xf]
        %v665 = vld [vmem:[#allocation8 + $0x70] sm:$0xf]
        %v666 = vld [vmem:[#allocation8 + $0x74] sm:$0xf]
        %v667 = vld [vmem:[#allocation8 + $0x78] sm:$0xf]
        %v668 = vld [vmem:[#allocation8 + $0x7c] sm:$0xf]
        %v685 = vunpack.c.l.b16 %v653
        %v686 = vunpack.c.l.b16 %v654
        %v687 = vunpack.c.l.b16 %v655
        %v688 = vunpack.c.l.b16 %v656
        %v689 = vunpack.c.l.b16 %v657
        %v690 = vunpack.c.l.b16 %v658
        %v691 = vunpack.c.l.b16 %v659
        %v692 = vunpack.c.l.b16 %v660
        %v693 = vunpack.c.l.b16 %v661
        %v694 = vunpack.c.l.b16 %v662
        %v695 = vunpack.c.l.b16 %v663
        %v696 = vunpack.c.l.b16 %v664
        %v697 = vunpack.c.l.b16 %v665
        %v698 = vunpack.c.l.b16 %v666
        %v699 = vunpack.c.l.b16 %v667
        %v700 = vunpack.c.l.b16 %v668
        %v701 = vpack.c.b16 %v686, %v685
        %v702 = vpack.c.b16 %v688, %v687
        %v703 = vpack.c.b16 %v690, %v689
        %v704 = vpack.c.b16 %v692, %v691
        %v705 = vpack.c.b16 %v694, %v693
        %v706 = vpack.c.b16 %v696, %v695
        %v707 = vpack.c.b16 %v698, %v697
        %v708 = vpack.c.b16 %v700, %v699
        %717 = vmatprep.subr.bf16.mxu0 0
        %718 = vmatpush1.bf16.msra.mxu0 %v701
        %719 = vmatprep.subr.bf16.mxu0 0
        %720 = vmatpush1.bf16.msra.mxu0 %v702
        %721 = vmatprep.subr.bf16.mxu0 0
        %722 = vmatpush1.bf16.msra.mxu0 %v703
        %723 = vmatprep.subr.bf16.mxu0 0
        %724 = vmatpush1.bf16.msra.mxu0 %v704
        %725 = vmatprep.subr.bf16.mxu0 0
        %726 = vmatpush1.bf16.msra.mxu0 %v705
        %727 = vmatprep.subr.bf16.mxu0 0
        %728 = vmatpush1.bf16.msra.mxu0 %v706
        %729 = vmatprep.subr.bf16.mxu0 0
        %730 = vmatpush1.bf16.msra.mxu0 %v707
        %731 = vmatprep.subr.bf16.mxu0 0
        %732 = vmatpush1.bf16.msra.mxu0 %v708
        %733 = vmatprep.subr.bf16.mxu0 0
        %734 = vmatpush1.bf16.msra.mxu0 0
        %735 = vmatprep.subr.bf16.mxu0 0
        %736 = vmatpush1.bf16.msra.mxu0 0
        %737 = vmatprep.subr.bf16.mxu0 0
        %738 = vmatpush1.bf16.msra.mxu0 0
        %739 = vmatprep.subr.bf16.mxu0 0
        %740 = vmatpush1.bf16.msra.mxu0 0
        %741 = vmatprep.subr.bf16.mxu0 0
        %742 = vmatpush1.bf16.msra.mxu0 0
        %743 = vmatprep.subr.bf16.mxu0 0
        %744 = vmatpush1.bf16.msra.mxu0 0
        %745 = vmatprep.subr.bf16.mxu0 0
        %746 = vmatpush1.bf16.msra.mxu0 0
        %747 = vmatprep.subr.bf16.mxu0 0
        %748 = vmatpush1.bf16.msra.mxu0 0
        %749 = vmatprep.mubr.bf16.mxu0 0
        %750 = vmatmul.mubr.bf16.gmra.mrb[0].mxu0 %v652
        %v751 = vpop.f32.mrb[0].mxu0
        %v752 = vadd.f32 0.0, %v751
        %v753 = vpop.f32.mrb[0].mxu0
        %v754 = vpop.f32.mrb[0].mxu0
        %v755 = vpop.f32.mrb[0].mxu0
        %756 = vdwg.mxu0
        %v773 = vunpack.c.l.b16 %v593
        %v774 = vunpack.c.l.b16 %v594
        %v775 = vunpack.c.l.b16 %v595
        %v776 = vunpack.c.l.b16 %v596
        %v777 = vunpack.c.l.b16 %v597
        %v778 = vunpack.c.l.b16 %v598
        %v779 = vunpack.c.l.b16 %v599
        %v780 = vunpack.c.l.b16 %v600
        %v781 = vunpack.c.l.b16 %v601
        %v782 = vunpack.c.l.b16 %v602
        %v783 = vunpack.c.l.b16 %v603
        %v784 = vunpack.c.l.b16 %v604
        %v785 = vunpack.c.l.b16 %v605
        %v786 = vunpack.c.l.b16 %v606
        %v787 = vunpack.c.l.b16 %v607
        %v788 = vunpack.c.l.b16 %v608
        %v789 = vpack.c.b16 %v774, %v773
        %v790 = vpack.c.b16 %v776, %v775
        %v791 = vpack.c.b16 %v778, %v777
        %v792 = vpack.c.b16 %v780, %v779
        %v793 = vpack.c.b16 %v782, %v781
        %v794 = vpack.c.b16 %v784, %v783
        %v795 = vpack.c.b16 %v786, %v785
        %v796 = vpack.c.b16 %v788, %v787
        %805 = vmatprep.subr.bf16.mxu0 0
        %806 = vmatpush1.bf16.msra.mxu0 %v789
        %807 = vmatprep.subr.bf16.mxu0 0
        %808 = vmatpush1.bf16.msra.mxu0 %v790
        %809 = vmatprep.subr.bf16.mxu0 0
        %810 = vmatpush1.bf16.msra.mxu0 %v791
        %811 = vmatprep.subr.bf16.mxu0 0
        %812 = vmatpush1.bf16.msra.mxu0 %v792
        %813 = vmatprep.subr.bf16.mxu0 0
        %814 = vmatpush1.bf16.msra.mxu0 %v793
        %815 = vmatprep.subr.bf16.mxu0 0
        %816 = vmatpush1.bf16.msra.mxu0 %v794
        %817 = vmatprep.subr.bf16.mxu0 0
        %818 = vmatpush1.bf16.msra.mxu0 %v795
        %819 = vmatprep.subr.bf16.mxu0 0
        %820 = vmatpush1.bf16.msra.mxu0 %v796
        %821 = vmatprep.subr.bf16.mxu0 0
        %822 = vmatpush1.bf16.msra.mxu0 0
        %823 = vmatprep.subr.bf16.mxu0 0
        %824 = vmatpush1.bf16.msra.mxu0 0
        %825 = vmatprep.subr.bf16.mxu0 0
        %826 = vmatpush1.bf16.msra.mxu0 0
        %827 = vmatprep.subr.bf16.mxu0 0
        %828 = vmatpush1.bf16.msra.mxu0 0
        %829 = vmatprep.subr.bf16.mxu0 0
        %830 = vmatpush1.bf16.msra.mxu0 0
        %831 = vmatprep.subr.bf16.mxu0 0
        %832 = vmatpush1.bf16.msra.mxu0 0
        %833 = vmatprep.subr.bf16.mxu0 0
        %834 = vmatpush1.bf16.msra.mxu0 0
        %835 = vmatprep.subr.bf16.mxu0 0
        %836 = vmatpush1.bf16.msra.mxu0 0
        %837 = vmatprep.mubr.bf16.mxu0 0
        %838 = vmatmul.mubr.bf16.gmra.mrb[0].mxu0 %v592
        %v839 = vpop.f32.mrb[0].mxu0
        %v840 = vadd.f32 %v752, %v839
        %v841 = vpop.f32.mrb[0].mxu0
        %v842 = vpop.f32.mrb[0].mxu0
        %v843 = vpop.f32.mrb[0].mxu0
        %844 = vdwg.mxu0
        %v845 = vld [vmem:[%s406 + $0x10] sm:$0xff]
        %v846 = vpack.c.bf16 %v845, %v845
        %847 = vmatprep.subr.bf16.mxu0 0
        %848 = vmatpush1.bf16.msra.mxu0 %v535
        %849 = vmatprep.subr.bf16.mxu0 0
        %850 = vmatpush1.bf16.msra.mxu0 %v536
        %851 = vmatprep.subr.bf16.mxu0 0
        %852 = vmatpush1.bf16.msra.mxu0 %v537
        %853 = vmatprep.subr.bf16.mxu0 0
        %854 = vmatpush1.bf16.msra.mxu0 %v538
        %855 = vmatprep.subr.bf16.mxu0 0
        %856 = vmatpush1.bf16.msra.mxu0 %v539
        %857 = vmatprep.subr.bf16.mxu0 0
        %858 = vmatpush1.bf16.msra.mxu0 %v540
        %859 = vmatprep.subr.bf16.mxu0 0
        %860 = vmatpush1.bf16.msra.mxu0 %v541
        %861 = vmatprep.subr.bf16.mxu0 0
        %862 = vmatpush1.bf16.msra.mxu0 %v542
        %863 = vmatprep.subr.bf16.mxu0 0
        %864 = vmatpush1.bf16.msra.mxu0 0
        %865 = vmatprep.subr.bf16.mxu0 0
        %866 = vmatpush1.bf16.msra.mxu0 0
        %867 = vmatprep.subr.bf16.mxu0 0
        %868 = vmatpush1.bf16.msra.mxu0 0
        %869 = vmatprep.subr.bf16.mxu0 0
        %870 = vmatpush1.bf16.msra.mxu0 0
        %871 = vmatprep.subr.bf16.mxu0 0
        %872 = vmatpush1.bf16.msra.mxu0 0
        %873 = vmatprep.subr.bf16.mxu0 0
        %874 = vmatpush1.bf16.msra.mxu0 0
        %875 = vmatprep.subr.bf16.mxu0 0
        %876 = vmatpush1.bf16.msra.mxu0 0
        %877 = vmatprep.subr.bf16.mxu0 0
        %878 = vmatpush1.bf16.msra.mxu0 0
        %879 = vmatprep.mubr.bf16.mxu0 0
        %880 = vmatmul.mubr.bf16.gmra.mrb[0].mxu0 %v846
        %v881 = vpop.f32.mrb[0].mxu0
        %v882 = vadd.f32 0.0, %v881
        %v883 = vpop.f32.mrb[0].mxu0
        %v884 = vpop.f32.mrb[0].mxu0
        %v885 = vpop.f32.mrb[0].mxu0
        %886 = vdwg.mxu0
        %v887 = vtanh.pop %v882
        %v888 = vpack.c.bf16 %v887, %v887
        %v889 = vld [vmem:[#allocation8 + $0x80] sm:$0xf]
        %v890 = vld [vmem:[#allocation8 + $0x84] sm:$0xf]
        %v891 = vld [vmem:[#allocation8 + $0x88] sm:$0xf]
        %v892 = vld [vmem:[#allocation8 + $0x8c] sm:$0xf]
        %v893 = vld [vmem:[#allocation8 + $0x90] sm:$0xf]
        %v894 = vld [vmem:[#allocation8 + $0x94] sm:$0xf]
        %v895 = vld [vmem:[#allocation8 + $0x98] sm:$0xf]
        %v896 = vld [vmem:[#allocation8 + $0x9c] sm:$0xf]
        %v897 = vld [vmem:[#allocation8 + $0xa0] sm:$0xf]
        %v898 = vld [vmem:[#allocation8 + $0xa4] sm:$0xf]
        %v899 = vld [vmem:[#allocation8 + $0xa8] sm:$0xf]
        %v900 = vld [vmem:[#allocation8 + $0xac] sm:$0xf]
        %v901 = vld [vmem:[#allocation8 + $0xb0] sm:$0xf]
        %v902 = vld [vmem:[#allocation8 + $0xb4] sm:$0xf]
        %v903 = vld [vmem:[#allocation8 + $0xb8] sm:$0xf]
        %v904 = vld [vmem:[#allocation8 + $0xbc] sm:$0xf]
        %v921 = vunpack.c.l.b16 %v889
        %v922 = vunpack.c.l.b16 %v890
        %v923 = vunpack.c.l.b16 %v891
        %v924 = vunpack.c.l.b16 %v892
        %v925 = vunpack.c.l.b16 %v893
        %v926 = vunpack.c.l.b16 %v894
        %v927 = vunpack.c.l.b16 %v895
        %v928 = vunpack.c.l.b16 %v896
        %v929 = vunpack.c.l.b16 %v897
        %v930 = vunpack.c.l.b16 %v898
        %v931 = vunpack.c.l.b16 %v899
        %v932 = vunpack.c.l.b16 %v900
        %v933 = vunpack.c.l.b16 %v901
        %v934 = vunpack.c.l.b16 %v902
        %v935 = vunpack.c.l.b16 %v903
        %v936 = vunpack.c.l.b16 %v904
        %v937 = vpack.c.b16 %v922, %v921
        %v938 = vpack.c.b16 %v924, %v923
        %v939 = vpack.c.b16 %v926, %v925
        %v940 = vpack.c.b16 %v928, %v927
        %v941 = vpack.c.b16 %v930, %v929
        %v942 = vpack.c.b16 %v932, %v931
        %v943 = vpack.c.b16 %v934, %v933
        %v944 = vpack.c.b16 %v936, %v935
        %953 = vmatprep.subr.bf16.mxu0 0
        %954 = vmatpush1.bf16.msra.mxu0 %v937
        %955 = vmatprep.subr.bf16.mxu0 0
        %956 = vmatpush1.bf16.msra.mxu0 %v938
        %957 = vmatprep.subr.bf16.mxu0 0
        %958 = vmatpush1.bf16.msra.mxu0 %v939
        %959 = vmatprep.subr.bf16.mxu0 0
        %960 = vmatpush1.bf16.msra.mxu0 %v940
        %961 = vmatprep.subr.bf16.mxu0 0
        %962 = vmatpush1.bf16.msra.mxu0 %v941
        %963 = vmatprep.subr.bf16.mxu0 0
        %964 = vmatpush1.bf16.msra.mxu0 %v942
        %965 = vmatprep.subr.bf16.mxu0 0
        %966 = vmatpush1.bf16.msra.mxu0 %v943
        %967 = vmatprep.subr.bf16.mxu0 0
        %968 = vmatpush1.bf16.msra.mxu0 %v944
        %969 = vmatprep.subr.bf16.mxu0 0
        %970 = vmatpush1.bf16.msra.mxu0 0
        %971 = vmatprep.subr.bf16.mxu0 0
        %972 = vmatpush1.bf16.msra.mxu0 0
        %973 = vmatprep.subr.bf16.mxu0 0
        %974 = vmatpush1.bf16.msra.mxu0 0
        %975 = vmatprep.subr.bf16.mxu0 0
        %976 = vmatpush1.bf16.msra.mxu0 0
        %977 = vmatprep.subr.bf16.mxu0 0
        %978 = vmatpush1.bf16.msra.mxu0 0
        %979 = vmatprep.subr.bf16.mxu0 0
        %980 = vmatpush1.bf16.msra.mxu0 0
        %981 = vmatprep.subr.bf16.mxu0 0
        %982 = vmatpush1.bf16.msra.mxu0 0
        %983 = vmatprep.subr.bf16.mxu0 0
        %984 = vmatpush1.bf16.msra.mxu0 0
        %985 = vmatprep.mubr.bf16.mxu0 0
        %986 = vmatmul.mubr.bf16.gmra.mrb[0].mxu0 %v888
        %v987 = vpop.f32.mrb[0].mxu0
        %v988 = vadd.f32 0.0, %v987
        %v989 = vpop.f32.mrb[0].mxu0
        %v990 = vpop.f32.mrb[0].mxu0
        %v991 = vpop.f32.mrb[0].mxu0
        %992 = vdwg.mxu0
        %v993 = vadd.f32 %v840, %v988
        %v994 = vlaneseq
        %v995 = vand.u32 %v994, 127
        %vm996 = vcmp.lt.s32.totalorder %v995, 12
        %v997 = vsel %vm996, 1, 0
        %vm998 = vcmp.eq.s32.totalorder %v997, 1
        %v999 = vsel %vm998, %v993, -1e+09
        %vm1000 = vcmp.ge.s32.totalorder %v995, 0
        %vm1001 = vcmp.lt.s32.totalorder %v995, 4
        %vm1002 = vmand %vm1000, %vm1001
        %v1003 = vsel %vm1002, 1, 0
        %vm1004 = vcmp.eq.s32.totalorder %v1003, 1
        %v1005 = vsel %vm1004, %v999, -1e+30
        %1006 = vmax.xlane.f32.xlu0 %v1005
        %v1007 = vpop.xlane.xlu0 %1006
        %v1008 = vsel %vm1004, %v1007, 0.0
        %vm1009 = vcmp.ge.s32.totalorder %v995, 4
        %vm1010 = vcmp.lt.s32.totalorder %v995, 8
        %vm1011 = vmand %vm1009, %vm1010
        %v1012 = vsel %vm1011, 1, 0
        %vm1013 = vcmp.eq.s32.totalorder %v1012, 1
        %v1014 = vsel %vm1013, %v999, -1e+30
        %1015 = vmax.xlane.f32.xlu0 %v1014
        %v1016 = vpop.xlane.xlu0 %1015
        %v1017 = vsel %vm1013, %v1016, %v1008
        %vm1018 = vcmp.ge.s32.totalorder %v995, 8
        %vm1019 = vmand %vm1018, %vm996
        %v1020 = vsel %vm1019, 1, 0
        %vm1021 = vcmp.eq.s32.totalorder %v1020, 1
        %v1022 = vsel %vm1021, %v999, -1e+30
        %1023 = vmax.xlane.f32.xlu0 %v1022
        %v1024 = vpop.xlane.xlu0 %1023
        %v1025 = vsel %vm1021, %v1024, %v1017
        %v1026 = vsub.f32 %v999, %v1025
        %v1027 = vmul.f32 %v1026, 1.442695
        %v1028 = vpow.pop %v1027
        %v1029 = vpack.c.bf16 %v1028, %v1028
        %v1030 = vld [vmem:[#allocation10] sm:$0xf]
        %v1031 = vld [vmem:[#allocation10 + $0x4] sm:$0xf]
        %v1032 = vld [vmem:[#allocation10 + $0x8] sm:$0xf]
        %v1033 = vld [vmem:[#allocation10 + $0xc] sm:$0xf]
        %v1034 = vld [vmem:[#allocation10 + $0x10] sm:$0xf]
        %v1035 = vld [vmem:[#allocation10 + $0x14] sm:$0xf]
        %v1036 = vld [vmem:[#allocation10 + $0x18] sm:$0xf]
        %v1037 = vld [vmem:[#allocation10 + $0x1c] sm:$0xf]
        %v1038 = vld [vmem:[#allocation10 + $0x20] sm:$0xf]
        %v1039 = vld [vmem:[#allocation10 + $0x24] sm:$0xf]
        %v1040 = vld [vmem:[#allocation10 + $0x28] sm:$0xf]
        %v1041 = vld [vmem:[#allocation10 + $0x2c] sm:$0xf]
        %v1042 = vld [vmem:[#allocation10 + $0x30] sm:$0xf]
        %v1043 = vld [vmem:[#allocation10 + $0x34] sm:$0xf]
        %v1044 = vld [vmem:[#allocation10 + $0x38] sm:$0xf]
        %v1045 = vld [vmem:[#allocation10 + $0x3c] sm:$0xf]
        %v1062 = vunpack.c.l.b16 %v1030
        %v1063 = vunpack.c.l.b16 %v1031
        %v1064 = vunpack.c.l.b16 %v1032
        %v1065 = vunpack.c.l.b16 %v1033
        %v1066 = vunpack.c.l.b16 %v1034
        %v1067 = vunpack.c.l.b16 %v1035
        %v1068 = vunpack.c.l.b16 %v1036
        %v1069 = vunpack.c.l.b16 %v1037
        %v1070 = vunpack.c.l.b16 %v1038
        %v1071 = vunpack.c.l.b16 %v1039
        %v1072 = vunpack.c.l.b16 %v1040
        %v1073 = vunpack.c.l.b16 %v1041
        %v1074 = vunpack.c.l.b16 %v1042
        %v1075 = vunpack.c.l.b16 %v1043
        %v1076 = vunpack.c.l.b16 %v1044
        %v1077 = vunpack.c.l.b16 %v1045
        %v1078 = vpack.c.b16 %v1063, %v1062
        %v1079 = vpack.c.b16 %v1065, %v1064
        %v1080 = vpack.c.b16 %v1067, %v1066
        %v1081 = vpack.c.b16 %v1069, %v1068
        %v1082 = vpack.c.b16 %v1071, %v1070
        %v1083 = vpack.c.b16 %v1073, %v1072
        %v1084 = vpack.c.b16 %v1075, %v1074
        %v1085 = vpack.c.b16 %v1077, %v1076
        %1094 = vmatprep.subr.bf16.mxu0 0
        %1095 = vmatpush1.bf16.msra.mxu0 %v1078
        %1096 = vmatprep.subr.bf16.mxu0 0
        %1097 = vmatpush1.bf16.msra.mxu0 %v1079
        %1098 = vmatprep.subr.bf16.mxu0 0
        %1099 = vmatpush1.bf16.msra.mxu0 %v1080
        %1100 = vmatprep.subr.bf16.mxu0 0
        %1101 = vmatpush1.bf16.msra.mxu0 %v1081
        %1102 = vmatprep.subr.bf16.mxu0 0
        %1103 = vmatpush1.bf16.msra.mxu0 %v1082
        %1104 = vmatprep.subr.bf16.mxu0 0
        %1105 = vmatpush1.bf16.msra.mxu0 %v1083
        %1106 = vmatprep.subr.bf16.mxu0 0
        %1107 = vmatpush1.bf16.msra.mxu0 %v1084
        %1108 = vmatprep.subr.bf16.mxu0 0
        %1109 = vmatpush1.bf16.msra.mxu0 %v1085
        %1110 = vmatprep.subr.bf16.mxu0 0
        %1111 = vmatpush1.bf16.msra.mxu0 0
        %1112 = vmatprep.subr.bf16.mxu0 0
        %1113 = vmatpush1.bf16.msra.mxu0 0
        %1114 = vmatprep.subr.bf16.mxu0 0
        %1115 = vmatpush1.bf16.msra.mxu0 0
        %1116 = vmatprep.subr.bf16.mxu0 0
        %1117 = vmatpush1.bf16.msra.mxu0 0
        %1118 = vmatprep.subr.bf16.mxu0 0
        %1119 = vmatpush1.bf16.msra.mxu0 0
        %1120 = vmatprep.subr.bf16.mxu0 0
        %1121 = vmatpush1.bf16.msra.mxu0 0
        %1122 = vmatprep.subr.bf16.mxu0 0
        %1123 = vmatpush1.bf16.msra.mxu0 0
        %1124 = vmatprep.subr.bf16.mxu0 0
        %1125 = vmatpush1.bf16.msra.mxu0 0
        %1126 = vmatprep.mubr.bf16.mxu0 0
        %1127 = vmatmul.mubr.bf16.gmra.mrb[0].mxu0 %v1029
        %v1128 = vpop.f32.mrb[0].mxu0
        %v1129 = vadd.f32 0.0, %v1128
        %v1130 = vpop.f32.mrb[0].mxu0
        %v1131 = vpop.f32.mrb[0].mxu0
        %v1132 = vpop.f32.mrb[0].mxu0
        %1133 = vdwg.mxu0
        %v1134 = vmax.f32 %v1129, 1e-30
        %v1135 = vrcp.pop %v1134
        %v1136 = vmul.f32 %v1028, %v1135
        %v1137 = vpack.c.bf16 %v1136, %v1136
        %1138 = vst [vmem:[%s483] sm:$0xf] %v1137
        %v1139 = vld [vmem:[%s415] sm:$0xff]
        %v1140 = vld [vmem:[#allocation11] sm:$0xf]
        %v1141 = vld [vmem:[#allocation11 + $0xc] sm:$0xf]
        %v1142 = vld [vmem:[#allocation11 + $0x18] sm:$0xf]
        %v1143 = vld [vmem:[#allocation11 + $0x24] sm:$0xf]
        %v1144 = vld [vmem:[#allocation11 + $0x30] sm:$0xf]
        %v1145 = vld [vmem:[#allocation11 + $0x3c] sm:$0xf]
        %v1146 = vld [vmem:[#allocation11 + $0x48] sm:$0xf]
        %v1147 = vld [vmem:[#allocation11 + $0x54] sm:$0xf]
        %v1148 = vld [vmem:[#allocation11 + $0x60] sm:$0xf]
        %v1149 = vld [vmem:[#allocation11 + $0x6c] sm:$0xf]
        %v1150 = vld [vmem:[#allocation11 + $0x78] sm:$0xf]
        %v1151 = vld [vmem:[#allocation11 + $0x84] sm:$0xf]
        %v1152 = vld [vmem:[#allocation11 + $0x90] sm:$0xf]
        %v1153 = vld [vmem:[#allocation11 + $0x9c] sm:$0xf]
        %v1154 = vld [vmem:[#allocation11 + $0xa8] sm:$0xf]
        %v1155 = vld [vmem:[#allocation11 + $0xb4] sm:$0xf]
        %v1172 = vunpack.c.l.b16 %v1140
        %v1173 = vunpack.c.l.b16 %v1141
        %v1174 = vunpack.c.l.b16 %v1142
        %v1175 = vunpack.c.l.b16 %v1143
        %v1176 = vunpack.c.l.b16 %v1144
        %v1177 = vunpack.c.l.b16 %v1145
        %v1178 = vunpack.c.l.b16 %v1146
        %v1179 = vunpack.c.l.b16 %v1147
        %v1180 = vunpack.c.l.b16 %v1148
        %v1181 = vunpack.c.l.b16 %v1149
        %v1182 = vunpack.c.l.b16 %v1150
        %v1183 = vunpack.c.l.b16 %v1151
        %v1184 = vunpack.c.l.b16 %v1152
        %v1185 = vunpack.c.l.b16 %v1153
        %v1186 = vunpack.c.l.b16 %v1154
        %v1187 = vunpack.c.l.b16 %v1155
        %v1188 = vpack.c.b16 %v1173, %v1172
        %v1189 = vpack.c.b16 %v1175, %v1174
        %v1190 = vpack.c.b16 %v1177, %v1176
        %v1191 = vpack.c.b16 %v1179, %v1178
        %v1192 = vpack.c.b16 %v1181, %v1180
        %v1193 = vpack.c.b16 %v1183, %v1182
        %v1194 = vpack.c.b16 %v1185, %v1184
        %v1195 = vpack.c.b16 %v1187, %v1186
        %1204 = vmatprep.subr.bf16.mxu0 0
        %1205 = vmatpush1.bf16.msra.mxu0 %v1188
        %1206 = vmatprep.subr.bf16.mxu0 0
        %1207 = vmatpush1.bf16.msra.mxu0 %v1189
        %1208 = vmatprep.subr.bf16.mxu0 0
        %1209 = vmatpush1.bf16.msra.mxu0 %v1190
        %1210 = vmatprep.subr.bf16.mxu0 0
        %1211 = vmatpush1.bf16.msra.mxu0 %v1191
        %1212 = vmatprep.subr.bf16.mxu0 0
        %1213 = vmatpush1.bf16.msra.mxu0 %v1192
        %1214 = vmatprep.subr.bf16.mxu0 0
        %1215 = vmatpush1.bf16.msra.mxu0 %v1193
        %1216 = vmatprep.subr.bf16.mxu0 0
        %1217 = vmatpush1.bf16.msra.mxu0 %v1194
        %1218 = vmatprep.subr.bf16.mxu0 0
        %1219 = vmatpush1.bf16.msra.mxu0 %v1195
        %1220 = vmatprep.subr.bf16.mxu0 0
        %1221 = vmatpush1.bf16.msra.mxu0 0
        %1222 = vmatprep.subr.bf16.mxu0 0
        %1223 = vmatpush1.bf16.msra.mxu0 0
        %1224 = vmatprep.subr.bf16.mxu0 0
        %1225 = vmatpush1.bf16.msra.mxu0 0
        %1226 = vmatprep.subr.bf16.mxu0 0
        %1227 = vmatpush1.bf16.msra.mxu0 0
        %1228 = vmatprep.subr.bf16.mxu0 0
        %1229 = vmatpush1.bf16.msra.mxu0 0
        %1230 = vmatprep.subr.bf16.mxu0 0
        %1231 = vmatpush1.bf16.msra.mxu0 0
        %1232 = vmatprep.subr.bf16.mxu0 0
        %1233 = vmatpush1.bf16.msra.mxu0 0
        %1234 = vmatprep.subr.bf16.mxu0 0
        %1235 = vmatpush1.bf16.msra.mxu0 0
        %1236 = vmatprep.mubr.bf16.mxu0 0
        %1237 = vmatmul.mubr.bf16.gmra.mrb[0].mxu0 %v1137
        %v1238 = vpop.f32.mrb[0].mxu0
        %v1239 = vadd.f32 0.0, %v1238
        %v1240 = vpop.f32.mrb[0].mxu0
        %v1241 = vpop.f32.mrb[0].mxu0
        %v1242 = vpop.f32.mrb[0].mxu0
        %1243 = vdwg.mxu0
        %v1244 = vmul.f32 %v586, %v1239
        %v1245 = vadd.f32 %v1139, %v1244
        %v1246 = vld [vmem:[#allocation11 + $0x4] sm:$0xf]
        %v1247 = vld [vmem:[#allocation11 + $0x10] sm:$0xf]
        %v1248 = vld [vmem:[#allocation11 + $0x1c] sm:$0xf]
        %v1249 = vld [vmem:[#allocation11 + $0x28] sm:$0xf]
        %v1250 = vld [vmem:[#allocation11 + $0x34] sm:$0xf]
        %v1251 = vld [vmem:[#allocation11 + $0x40] sm:$0xf]
        %v1252 = vld [vmem:[#allocation11 + $0x4c] sm:$0xf]
        %v1253 = vld [vmem:[#allocation11 + $0x58] sm:$0xf]
        %v1254 = vld [vmem:[#allocation11 + $0x64] sm:$0xf]
        %v1255 = vld [vmem:[#allocation11 + $0x70] sm:$0xf]
        %v1256 = vld [vmem:[#allocation11 + $0x7c] sm:$0xf]
        %v1257 = vld [vmem:[#allocation11 + $0x88] sm:$0xf]
        %v1258 = vld [vmem:[#allocation11 + $0x94] sm:$0xf]
        %v1259 = vld [vmem:[#allocation11 + $0xa0] sm:$0xf]
        %v1260 = vld [vmem:[#allocation11 + $0xac] sm:$0xf]
        %v1261 = vld [vmem:[#allocation11 + $0xb8] sm:$0xf]
        %v1278 = vunpack.c.l.b16 %v1246
        %v1279 = vunpack.c.l.b16 %v1247
        %v1280 = vunpack.c.l.b16 %v1248
        %v1281 = vunpack.c.l.b16 %v1249
        %v1282 = vunpack.c.l.b16 %v1250
        %v1283 = vunpack.c.l.b16 %v1251
        %v1284 = vunpack.c.l.b16 %v1252
        %v1285 = vunpack.c.l.b16 %v1253
        %v1286 = vunpack.c.l.b16 %v1254
        %v1287 = vunpack.c.l.b16 %v1255
        %v1288 = vunpack.c.l.b16 %v1256
        %v1289 = vunpack.c.l.b16 %v1257
        %v1290 = vunpack.c.l.b16 %v1258
        %v1291 = vunpack.c.l.b16 %v1259
        %v1292 = vunpack.c.l.b16 %v1260
        %v1293 = vunpack.c.l.b16 %v1261
        %v1294 = vpack.c.b16 %v1279, %v1278
        %v1295 = vpack.c.b16 %v1281, %v1280
        %v1296 = vpack.c.b16 %v1283, %v1282
        %v1297 = vpack.c.b16 %v1285, %v1284
        %v1298 = vpack.c.b16 %v1287, %v1286
        %v1299 = vpack.c.b16 %v1289, %v1288
        %v1300 = vpack.c.b16 %v1291, %v1290
        %v1301 = vpack.c.b16 %v1293, %v1292
        %1310 = vmatprep.subr.bf16.mxu0 0
        %1311 = vmatpush1.bf16.msra.mxu0 %v1294
        %1312 = vmatprep.subr.bf16.mxu0 0
        %1313 = vmatpush1.bf16.msra.mxu0 %v1295
        %1314 = vmatprep.subr.bf16.mxu0 0
        %1315 = vmatpush1.bf16.msra.mxu0 %v1296
        %1316 = vmatprep.subr.bf16.mxu0 0
        %1317 = vmatpush1.bf16.msra.mxu0 %v1297
        %1318 = vmatprep.subr.bf16.mxu0 0
        %1319 = vmatpush1.bf16.msra.mxu0 %v1298
        %1320 = vmatprep.subr.bf16.mxu0 0
        %1321 = vmatpush1.bf16.msra.mxu0 %v1299
        %1322 = vmatprep.subr.bf16.mxu0 0
        %1323 = vmatpush1.bf16.msra.mxu0 %v1300
        %1324 = vmatprep.subr.bf16.mxu0 0
        %1325 = vmatpush1.bf16.msra.mxu0 %v1301
        %1326 = vmatprep.subr.bf16.mxu0 0
        %1327 = vmatpush1.bf16.msra.mxu0 0
        %1328 = vmatprep.subr.bf16.mxu0 0
        %1329 = vmatpush1.bf16.msra.mxu0 0
        %1330 = vmatprep.subr.bf16.mxu0 0
        %1331 = vmatpush1.bf16.msra.mxu0 0
        %1332 = vmatprep.subr.bf16.mxu0 0
        %1333 = vmatpush1.bf16.msra.mxu0 0
        %1334 = vmatprep.subr.bf16.mxu0 0
        %1335 = vmatpush1.bf16.msra.mxu0 0
        %1336 = vmatprep.subr.bf16.mxu0 0
        %1337 = vmatpush1.bf16.msra.mxu0 0
        %1338 = vmatprep.subr.bf16.mxu0 0
        %1339 = vmatpush1.bf16.msra.mxu0 0
        %1340 = vmatprep.subr.bf16.mxu0 0
        %1341 = vmatpush1.bf16.msra.mxu0 0
        %1342 = vmatprep.mubr.bf16.mxu0 0
        %1343 = vmatmul.mubr.bf16.gmra.mrb[0].mxu0 %v1137
        %v1344 = vpop.f32.mrb[0].mxu0
        %v1345 = vadd.f32 0.0, %v1344
        %v1346 = vpop.f32.mrb[0].mxu0
        %v1347 = vpop.f32.mrb[0].mxu0
        %v1348 = vpop.f32.mrb[0].mxu0
        %1349 = vdwg.mxu0
        %v1350 = vmul.f32 %v646, %v1345
        %v1351 = vadd.f32 %v1245, %v1350
        %v1352 = vld [vmem:[#allocation11 + $0x8] sm:$0xf]
        %v1353 = vld [vmem:[#allocation11 + $0x14] sm:$0xf]
        %v1354 = vld [vmem:[#allocation11 + $0x20] sm:$0xf]
        %v1355 = vld [vmem:[#allocation11 + $0x2c] sm:$0xf]
        %v1356 = vld [vmem:[#allocation11 + $0x38] sm:$0xf]
        %v1357 = vld [vmem:[#allocation11 + $0x44] sm:$0xf]
        %v1358 = vld [vmem:[#allocation11 + $0x50] sm:$0xf]
        %v1359 = vld [vmem:[#allocation11 + $0x5c] sm:$0xf]
        %v1360 = vld [vmem:[#allocation11 + $0x68] sm:$0xf]
        %v1361 = vld [vmem:[#allocation11 + $0x74] sm:$0xf]
        %v1362 = vld [vmem:[#allocation11 + $0x80] sm:$0xf]
        %v1363 = vld [vmem:[#allocation11 + $0x8c] sm:$0xf]
        %v1364 = vld [vmem:[#allocation11 + $0x98] sm:$0xf]
        %v1365 = vld [vmem:[#allocation11 + $0xa4] sm:$0xf]
        %v1366 = vld [vmem:[#allocation11 + $0xb0] sm:$0xf]
        %v1367 = vld [vmem:[#allocation11 + $0xbc] sm:$0xf]
        %v1384 = vunpack.c.l.b16 %v1352
        %v1385 = vunpack.c.l.b16 %v1353
        %v1386 = vunpack.c.l.b16 %v1354
        %v1387 = vunpack.c.l.b16 %v1355
        %v1388 = vunpack.c.l.b16 %v1356
        %v1389 = vunpack.c.l.b16 %v1357
        %v1390 = vunpack.c.l.b16 %v1358
        %v1391 = vunpack.c.l.b16 %v1359
        %v1392 = vunpack.c.l.b16 %v1360
        %v1393 = vunpack.c.l.b16 %v1361
        %v1394 = vunpack.c.l.b16 %v1362
        %v1395 = vunpack.c.l.b16 %v1363
        %v1396 = vunpack.c.l.b16 %v1364
        %v1397 = vunpack.c.l.b16 %v1365
        %v1398 = vunpack.c.l.b16 %v1366
        %v1399 = vunpack.c.l.b16 %v1367
        %v1400 = vpack.c.b16 %v1385, %v1384
        %v1401 = vpack.c.b16 %v1387, %v1386
        %v1402 = vpack.c.b16 %v1389, %v1388
        %v1403 = vpack.c.b16 %v1391, %v1390
        %v1404 = vpack.c.b16 %v1393, %v1392
        %v1405 = vpack.c.b16 %v1395, %v1394
        %v1406 = vpack.c.b16 %v1397, %v1396
        %v1407 = vpack.c.b16 %v1399, %v1398
        %1416 = vmatprep.subr.bf16.mxu0 0
        %1417 = vmatpush1.bf16.msra.mxu0 %v1400
        %1418 = vmatprep.subr.bf16.mxu0 0
        %1419 = vmatpush1.bf16.msra.mxu0 %v1401
        %1420 = vmatprep.subr.bf16.mxu0 0
        %1421 = vmatpush1.bf16.msra.mxu0 %v1402
        %1422 = vmatprep.subr.bf16.mxu0 0
        %1423 = vmatpush1.bf16.msra.mxu0 %v1403
        %1424 = vmatprep.subr.bf16.mxu0 0
        %1425 = vmatpush1.bf16.msra.mxu0 %v1404
        %1426 = vmatprep.subr.bf16.mxu0 0
        %1427 = vmatpush1.bf16.msra.mxu0 %v1405
        %1428 = vmatprep.subr.bf16.mxu0 0
        %1429 = vmatpush1.bf16.msra.mxu0 %v1406
        %1430 = vmatprep.subr.bf16.mxu0 0
        %1431 = vmatpush1.bf16.msra.mxu0 %v1407
        %1432 = vmatprep.subr.bf16.mxu0 0
        %1433 = vmatpush1.bf16.msra.mxu0 0
        %1434 = vmatprep.subr.bf16.mxu0 0
        %1435 = vmatpush1.bf16.msra.mxu0 0
        %1436 = vmatprep.subr.bf16.mxu0 0
        %1437 = vmatpush1.bf16.msra.mxu0 0
        %1438 = vmatprep.subr.bf16.mxu0 0
        %1439 = vmatpush1.bf16.msra.mxu0 0
        %1440 = vmatprep.subr.bf16.mxu0 0
        %1441 = vmatpush1.bf16.msra.mxu0 0
        %1442 = vmatprep.subr.bf16.mxu0 0
        %1443 = vmatpush1.bf16.msra.mxu0 0
        %1444 = vmatprep.subr.bf16.mxu0 0
        %1445 = vmatpush1.bf16.msra.mxu0 0
        %1446 = vmatprep.subr.bf16.mxu0 0
        %1447 = vmatpush1.bf16.msra.mxu0 0
        %1448 = vmatprep.mubr.bf16.mxu0 0
        %1449 = vmatmul.mubr.bf16.gmra.mrb[0].mxu0 %v1137
        %v1450 = vpop.f32.mrb[0].mxu0
        %v1451 = vadd.f32 0.0, %v1450
        %v1452 = vpop.f32.mrb[0].mxu0
        %v1453 = vpop.f32.mrb[0].mxu0
        %v1454 = vpop.f32.mrb[0].mxu0
        %1455 = vdwg.mxu0
        %v1456 = vmul.f32 %v882, %v1451
        %v1457 = vadd.f32 %v1351, %v1456
        %v1458 = vmul.f32 %v1457, %v1457
        %v1459 = vpack.c.bf16 %v1458, %v1458
        %v1460 = vld [vmem:[#allocation13] sm:$0xf]
        %v1461 = vld [vmem:[#allocation13 + $0x4] sm:$0xf]
        %v1462 = vld [vmem:[#allocation13 + $0x8] sm:$0xf]
        %v1463 = vld [vmem:[#allocation13 + $0xc] sm:$0xf]
        %v1464 = vld [vmem:[#allocation13 + $0x10] sm:$0xf]
        %v1465 = vld [vmem:[#allocation13 + $0x14] sm:$0xf]
        %v1466 = vld [vmem:[#allocation13 + $0x18] sm:$0xf]
        %v1467 = vld [vmem:[#allocation13 + $0x1c] sm:$0xf]
        %v1468 = vld [vmem:[#allocation13 + $0x20] sm:$0xf]
        %v1469 = vld [vmem:[#allocation13 + $0x24] sm:$0xf]
        %v1470 = vld [vmem:[#allocation13 + $0x28] sm:$0xf]
        %v1471 = vld [vmem:[#allocation13 + $0x2c] sm:$0xf]
        %v1472 = vld [vmem:[#allocation13 + $0x30] sm:$0xf]
        %v1473 = vld [vmem:[#allocation13 + $0x34] sm:$0xf]
        %v1474 = vld [vmem:[#allocation13 + $0x38] sm:$0xf]
        %v1475 = vld [vmem:[#allocation13 + $0x3c] sm:$0xf]
        %v1492 = vunpack.c.l.b16 %v1460
        %v1493 = vunpack.c.l.b16 %v1461
        %v1494 = vunpack.c.l.b16 %v1462
        %v1495 = vunpack.c.l.b16 %v1463
        %v1496 = vunpack.c.l.b16 %v1464
        %v1497 = vunpack.c.l.b16 %v1465
        %v1498 = vunpack.c.l.b16 %v1466
        %v1499 = vunpack.c.l.b16 %v1467
        %v1500 = vunpack.c.l.b16 %v1468
        %v1501 = vunpack.c.l.b16 %v1469
        %v1502 = vunpack.c.l.b16 %v1470
        %v1503 = vunpack.c.l.b16 %v1471
        %v1504 = vunpack.c.l.b16 %v1472
        %v1505 = vunpack.c.l.b16 %v1473
        %v1506 = vunpack.c.l.b16 %v1474
        %v1507 = vunpack.c.l.b16 %v1475
        %v1508 = vpack.c.b16 %v1493, %v1492
        %v1509 = vpack.c.b16 %v1495, %v1494
        %v1510 = vpack.c.b16 %v1497, %v1496
        %v1511 = vpack.c.b16 %v1499, %v1498
        %v1512 = vpack.c.b16 %v1501, %v1500
        %v1513 = vpack.c.b16 %v1503, %v1502
        %v1514 = vpack.c.b16 %v1505, %v1504
        %v1515 = vpack.c.b16 %v1507, %v1506
        %1524 = vmatprep.subr.bf16.mxu0 0
        %1525 = vmatpush1.bf16.msra.mxu0 %v1508
        %1526 = vmatprep.subr.bf16.mxu0 0
        %1527 = vmatpush1.bf16.msra.mxu0 %v1509
        %1528 = vmatprep.subr.bf16.mxu0 0
        %1529 = vmatpush1.bf16.msra.mxu0 %v1510
        %1530 = vmatprep.subr.bf16.mxu0 0
        %1531 = vmatpush1.bf16.msra.mxu0 %v1511
        %1532 = vmatprep.subr.bf16.mxu0 0
        %1533 = vmatpush1.bf16.msra.mxu0 %v1512
        %1534 = vmatprep.subr.bf16.mxu0 0
        %1535 = vmatpush1.bf16.msra.mxu0 %v1513
        %1536 = vmatprep.subr.bf16.mxu0 0
        %1537 = vmatpush1.bf16.msra.mxu0 %v1514
        %1538 = vmatprep.subr.bf16.mxu0 0
        %1539 = vmatpush1.bf16.msra.mxu0 %v1515
        %1540 = vmatprep.subr.bf16.mxu0 0
        %1541 = vmatpush1.bf16.msra.mxu0 0
        %1542 = vmatprep.subr.bf16.mxu0 0
        %1543 = vmatpush1.bf16.msra.mxu0 0
        %1544 = vmatprep.subr.bf16.mxu0 0
        %1545 = vmatpush1.bf16.msra.mxu0 0
        %1546 = vmatprep.subr.bf16.mxu0 0
        %1547 = vmatpush1.bf16.msra.mxu0 0
        %1548 = vmatprep.subr.bf16.mxu0 0
        %1549 = vmatpush1.bf16.msra.mxu0 0
        %1550 = vmatprep.subr.bf16.mxu0 0
        %1551 = vmatpush1.bf16.msra.mxu0 0
        %1552 = vmatprep.subr.bf16.mxu0 0
        %1553 = vmatpush1.bf16.msra.mxu0 0
        %1554 = vmatprep.subr.bf16.mxu0 0
        %1555 = vmatpush1.bf16.msra.mxu0 0
        %1556 = vmatprep.mubr.bf16.mxu0 0
        %1557 = vmatmul.mubr.bf16.gmra.mrb[0].mxu0 %v1459
        %v1558 = vpop.f32.mrb[0].mxu0
        %v1559 = vadd.f32 0.0, %v1558
        %v1560 = vpop.f32.mrb[0].mxu0
        %v1561 = vpop.f32.mrb[0].mxu0
        %v1562 = vpop.f32.mrb[0].mxu0
        %1563 = vdwg.mxu0
        %v1564 = vmax.f32 %v1559, 1e-24
        %v1565 = vrsqrt.pop %v1564
        %v1566 = vpack.c.bf16 %v1565, %v1565
        %v1567 = vld [vmem:[#allocation14] sm:$0xf]
        %v1568 = vld [vmem:[#allocation14 + $0x4] sm:$0xf]
        %v1569 = vld [vmem:[#allocation14 + $0x8] sm:$0xf]
        %v1570 = vld [vmem:[#allocation14 + $0xc] sm:$0xf]
        %v1571 = vld [vmem:[#allocation14 + $0x10] sm:$0xf]
        %v1572 = vld [vmem:[#allocation14 + $0x14] sm:$0xf]
        %v1573 = vld [vmem:[#allocation14 + $0x18] sm:$0xf]
        %v1574 = vld [vmem:[#allocation14 + $0x1c] sm:$0xf]
        %v1575 = vld [vmem:[#allocation14 + $0x20] sm:$0xf]
        %v1576 = vld [vmem:[#allocation14 + $0x24] sm:$0xf]
        %v1577 = vld [vmem:[#allocation14 + $0x28] sm:$0xf]
        %v1578 = vld [vmem:[#allocation14 + $0x2c] sm:$0xf]
        %v1579 = vld [vmem:[#allocation14 + $0x30] sm:$0xf]
        %v1580 = vld [vmem:[#allocation14 + $0x34] sm:$0xf]
        %v1581 = vld [vmem:[#allocation14 + $0x38] sm:$0xf]
        %v1582 = vld [vmem:[#allocation14 + $0x3c] sm:$0xf]
        %v1599 = vunpack.c.l.b16 %v1567
        %v1600 = vunpack.c.l.b16 %v1568
        %v1601 = vunpack.c.l.b16 %v1569
        %v1602 = vunpack.c.l.b16 %v1570
        %v1603 = vunpack.c.l.b16 %v1571
        %v1604 = vunpack.c.l.b16 %v1572
        %v1605 = vunpack.c.l.b16 %v1573
        %v1606 = vunpack.c.l.b16 %v1574
        %v1607 = vunpack.c.l.b16 %v1575
        %v1608 = vunpack.c.l.b16 %v1576
        %v1609 = vunpack.c.l.b16 %v1577
        %v1610 = vunpack.c.l.b16 %v1578
        %v1611 = vunpack.c.l.b16 %v1579
        %v1612 = vunpack.c.l.b16 %v1580
        %v1613 = vunpack.c.l.b16 %v1581
        %v1614 = vunpack.c.l.b16 %v1582
        %v1615 = vpack.c.b16 %v1600, %v1599
        %v1616 = vpack.c.b16 %v1602, %v1601
        %v1617 = vpack.c.b16 %v1604, %v1603
        %v1618 = vpack.c.b16 %v1606, %v1605
        %v1619 = vpack.c.b16 %v1608, %v1607
        %v1620 = vpack.c.b16 %v1610, %v1609
        %v1621 = vpack.c.b16 %v1612, %v1611
        %v1622 = vpack.c.b16 %v1614, %v1613
        %1631 = vmatprep.subr.bf16.mxu0 0
        %1632 = vmatpush1.bf16.msra.mxu0 %v1615
        %1633 = vmatprep.subr.bf16.mxu0 0
        %1634 = vmatpush1.bf16.msra.mxu0 %v1616
        %1635 = vmatprep.subr.bf16.mxu0 0
        %1636 = vmatpush1.bf16.msra.mxu0 %v1617
        %1637 = vmatprep.subr.bf16.mxu0 0
        %1638 = vmatpush1.bf16.msra.mxu0 %v1618
        %1639 = vmatprep.subr.bf16.mxu0 0
        %1640 = vmatpush1.bf16.msra.mxu0 %v1619
        %1641 = vmatprep.subr.bf16.mxu0 0
        %1642 = vmatpush1.bf16.msra.mxu0 %v1620
        %1643 = vmatprep.subr.bf16.mxu0 0
        %1644 = vmatpush1.bf16.msra.mxu0 %v1621
        %1645 = vmatprep.subr.bf16.mxu0 0
        %1646 = vmatpush1.bf16.msra.mxu0 %v1622
        %1647 = vmatprep.subr.bf16.mxu0 0
        %1648 = vmatpush1.bf16.msra.mxu0 0
        %1649 = vmatprep.subr.bf16.mxu0 0
        %1650 = vmatpush1.bf16.msra.mxu0 0
        %1651 = vmatprep.subr.bf16.mxu0 0
        %1652 = vmatpush1.bf16.msra.mxu0 0
        %1653 = vmatprep.subr.bf16.mxu0 0
        %1654 = vmatpush1.bf16.msra.mxu0 0
        %1655 = vmatprep.subr.bf16.mxu0 0
        %1656 = vmatpush1.bf16.msra.mxu0 0
        %1657 = vmatprep.subr.bf16.mxu0 0
        %1658 = vmatpush1.bf16.msra.mxu0 0
        %1659 = vmatprep.subr.bf16.mxu0 0
        %1660 = vmatpush1.bf16.msra.mxu0 0
        %1661 = vmatprep.subr.bf16.mxu0 0
        %1662 = vmatpush1.bf16.msra.mxu0 0
        %1663 = vmatprep.mubr.bf16.mxu0 0
        %1664 = vmatmul.mubr.bf16.gmra.mrb[0].mxu0 %v1566
        %v1665 = vpop.f32.mrb[0].mxu0
        %v1666 = vadd.f32 0.0, %v1665
        %v1667 = vpop.f32.mrb[0].mxu0
        %v1668 = vpop.f32.mrb[0].mxu0
        %v1669 = vpop.f32.mrb[0].mxu0
        %1670 = vdwg.mxu0
        %v1671 = vmul.f32 %v1457, %v1666
        %v1672 = vpack.c.bf16 %v1671, %v1671
        %1673 = vst [vmem:[%s476] sm:$0xf] %v1672
        %s1674 = sand.u32 %s222, 1
        %s1675 = scalar_lea.sflag [#allocation4], %s1674
        %s1676 = sand.u32 %s222, 1
        %s1677 = smul.addr %s1676, 4
        %s1678 = scalar_lea.vmem [#allocation16], %s1677
        %s1679 = sand.u32 %s248, 1
        %s1680 = scalar_lea.sflag [#allocation18], %s1679
        %s1681 = sand.u32 %s248, 1
        %s1682 = smul.addr %s1681, 4
        %s1683 = scalar_lea.vmem [#allocation17], %s1682
        // Predicated region
        $region85: #{tpu_custom_call.1} parent=51 // pred_check
          %p1684 = pneg %p232
        $region86: #{tpu_custom_call.1} parent=51 // pred_check_branch
          %1686 = sbr.rel (%p1684) target = $region88
        $region87: #{tpu_custom_call.1} parent=51 // pred_region
          %s1688 = ssub.s32 64, 64
          %1689 = vsyncadd %s1675, %s1688
          %s1690 = smul.addr %s36, 64
          %s1691 = scalar_lea.hbm %s8, %s1690
          %s1693 = sshll.u32 %s1678, 4
          %s1694 = int_to_ptr.vmem [resolvable:$true] %s1693
          %1696 = dma.vmem_to_hbm [thread:$0]  %s1694, 64, %s1691, %s1675
        $region88: #{tpu_custom_call.1} parent=51 // pred_fallthru
          _
        // Predicated region
        $region89: #{tpu_custom_call.1} parent=51 // pred_check
          %p1697 = pneg %p258
        $region90: #{tpu_custom_call.1} parent=51 // pred_check_branch
          %1699 = sbr.rel (%p1697) target = $region92
        $region91: #{tpu_custom_call.1} parent=51 // pred_region
          %s1701 = ssub.s32 64, 64
          %1702 = vsyncadd %s1680, %s1701
          %s1703 = smul.addr %s36, 64
          %s1704 = scalar_lea.hbm %s9, %s1703
          %s1706 = sshll.u32 %s1683, 4
          %s1707 = int_to_ptr.vmem [resolvable:$true] %s1706
          %1709 = dma.vmem_to_hbm [thread:$0]  %s1707, 64, %s1704, %s1680
        $region92: #{tpu_custom_call.1} parent=51 // pred_fallthru
          _
      $region52: #{tpu_custom_call.1} parent=5 // pred_fallthru
        _
      %p1710 = scmp.le.s32.totalorder 2, %s31
      // Predicated region
      $region93: #{tpu_custom_call.1} parent=5 // pred_check
        %p1711 = pneg %p1710
      $region94: #{tpu_custom_call.1} parent=5 // pred_check_branch
        %1713 = sbr.rel (%p1711) target = $region96
      $region95: #{tpu_custom_call.1} parent=5 // pred_region
        %s1714 = ssub.s32 %s31, 2
        // Predicated region
        $region97: #{tpu_custom_call.1} parent=95 // pred_check
          %p1715 = pneg %p238
        $region98: #{tpu_custom_call.1} parent=95 // pred_check_branch
          %1717 = sbr.rel (%p1715) target = $region100
        $region99: #{tpu_custom_call.1} parent=95 // pred_region
          %s1718 = sand.u32 %s223, 1
          %s1719 = scalar_lea.sflag [#allocation4], %s1718
          %s1720 = sand.u32 %s223, 1
          %s1721 = smul.addr %s1720, 4
          %s1722 = scalar_lea.vmem [#allocation16], %s1721
          %1723 = dma.done %s1719, 64
        $region100: #{tpu_custom_call.1} parent=95 // pred_fallthru
          _
        // Predicated region
        $region101: #{tpu_custom_call.1} parent=95 // pred_check
          %p1724 = pneg %p264
        $region102: #{tpu_custom_call.1} parent=95 // pred_check_branch
          %1726 = sbr.rel (%p1724) target = $region104
        $region103: #{tpu_custom_call.1} parent=95 // pred_region
          %s1727 = sand.u32 %s249, 1
          %s1728 = scalar_lea.sflag [#allocation18], %s1727
          %s1729 = sand.u32 %s249, 1
          %s1730 = smul.addr %s1729, 4
          %s1731 = scalar_lea.vmem [#allocation17], %s1730
          %1732 = dma.done %s1728, 64
        $region104: #{tpu_custom_call.1} parent=95 // pred_fallthru
          _
      $region96: #{tpu_custom_call.1} parent=5 // pred_fallthru
        _
    $region6: #{tpu_custom_call.1} parent=1 // loop_footer
      %s35 = sadd.s32 1, %s31
    $region7: #{tpu_custom_call.1} parent=1 // loop_footer_branch
      %30 = sbr.rel target = $region3
    $region8: #{tpu_custom_call.1} parent=1 // loop_exit
      _
    %1733 = vsyncpa [#allocation3], 1
    %s1734 = scalar_lea.sflag [#allocation3], 1
    %1735 = vsyncpa %s1734, 1
    %1736 = vsyncpa [#allocation6], 1
    %s1737 = scalar_lea.sflag [#allocation6], 1
    %1738 = vsyncpa %s1737, 1
    %1739 = vsyncpa [#allocation9], 1
    %1740 = vsyncpa [#allocation12], 1
    %1741 = vsyncpa [#allocation15], 1
    %1742 = vsyncpa [#allocation4], 1
    %s1743 = scalar_lea.sflag [#allocation4], 1
    %1744 = vsyncpa %s1743, 1
    %1745 = vsyncpa [#allocation18], 1
    %s1746 = scalar_lea.sflag [#allocation18], 1
    %1747 = vsyncpa %s1746, 1

</llo_original>
